<compile_context>
chip_gen: v6e
topology: v6e:2x2x1
jax: 0.10.0
libtpu: 0.0.40
codegen_flags: <defaults>
</compile_context>

<pallas_src>
import functools

import jax
import jax.numpy as jnp
from jax.experimental import pallas as pl
from jax.experimental.pallas import tpu as pltpu


# ---------------------------------------------------------------------------
# Static layout constants
# ---------------------------------------------------------------------------
F_IN, F_IN_PAD = 500, 512          # node feature width (padded for 16-row bf16 tiles)
HID = 64                           # SAGE hidden width
H1, H1_PAD = 200, 256              # lin1 out (padded lane-dense)
H2, H2_PAD = 100, 128              # lin2/lin3 out (padded lane-dense)
N_CLS, N_CLS_PAD = 80, 128         # classifier out (padded lane-dense)

# bf16 weight-slab row offsets ([W_SLAB_ROWS, 128])
_OFF_CAT1 = 0                      # [512,128] SAGE1 [W_l | W_r]
_OFF_CAT2 = 512                    # [ 64,128] SAGE2 [W_l | W_r]
_OFF_CAT3 = 576                    # [ 64,128] SAGE3 [W_l | W_r]
_OFF_W1A = 640                     # [ 64,128] lin1 cols   0:128
_OFF_W1B = 704                     # [ 64,128] lin1 cols 128:256
_OFF_W2A = 768                     # [128,128] lin2 rows   0:128
_OFF_W2B = 896                     # [128,128] lin2 rows 128:256
_OFF_W3 = 1024                     # [128,128] lin3
_OFF_W4 = 1152                     # [128,128] lin4
W_SLAB_ROWS = 1280

# f32 bias-slab rows ([8, 256])
_BROW_SAGE1, _BROW_SAGE2, _BROW_SAGE3 = 0, 1, 2   # [:64]
_BROW_B1 = 3                                      # [:256]
_BROW_B2, _BROW_B3, _BROW_B4 = 4, 5, 6            # [:128]


# ---------------------------------------------------------------------------
# Single fused kernel: L1-norm -> 3x SAGEConv -> mean-pool -> MLP head
# ---------------------------------------------------------------------------
def _fused_forward_kernel(adj_ref, inv_deg_ref, x_ref, pool_ref, w_ref, b_ref, o_ref):
    f32 = jnp.float32
    bf16 = jnp.bfloat16

    bias = b_ref[...]                       # [8, 256] f32, loaded once

    # --- F.normalize(x, p=1, dim=-1): f32 row-sum accumulation, EUP reciprocal ---
    x = x_ref[...].astype(f32)              # [N, 512]; cols 500:512 are zero padding
    row_l1 = jnp.sum(jnp.abs(x), axis=-1, keepdims=True)
    inv_l1 = pl.reciprocal(jnp.maximum(row_l1, 1e-12), approx=True)
    h = (x * inv_l1).astype(bf16)

    adj = adj_ref[...]                      # [N, N] bf16 raw edge counts (exact ints)
    inv_deg = inv_deg_ref[...]              # [N, 1] f32, 1/max(deg_in, 1)

    def sage(h_b, row0, rows, bias_row):
        # One fused MXU pass gives both transforms:  h @ [W_l | W_r]  -> [N, 128]
        hw = jnp.dot(h_b, w_ref[row0:row0 + rows, :], preferred_element_type=f32)
        hl, root = hw[:, :HID], hw[:, HID:]
        # mean aggregation = (counts @ (h @ W_l)) * inv_deg   (exact 1/deg in f32)
        agg = jnp.dot(adj, hl.astype(bf16), preferred_element_type=f32) * inv_deg
        return agg + root + bias[bias_row:bias_row + 1, :HID]

    e = sage(h, _OFF_CAT1, F_IN_PAD, _BROW_SAGE1)
    e = sage(e.astype(bf16), _OFF_CAT2, HID, _BROW_SAGE2)
    e = sage(e.astype(bf16), _OFF_CAT3, HID, _BROW_SAGE3)

    # --- global_mean_pool: [B, N] @ [N, 64]  (tiny; keep f32 for accuracy) ---
    c = jnp.dot(pool_ref[...], e, preferred_element_type=f32)
    c_b = c.astype(bf16)

    # --- MLP head; BatchNorm (eval) folded into w/b; dropout = identity (eval) ---
    h1a = jnp.tanh(jnp.dot(c_b, w_ref[_OFF_W1A:_OFF_W1A + HID, :],
                           preferred_element_type=f32) + bias[_BROW_B1:_BROW_B1 + 1, :128])
    h1b = jnp.tanh(jnp.dot(c_b, w_ref[_OFF_W1B:_OFF_W1B + HID, :],
                           preferred_element_type=f32) + bias[_BROW_B1:_BROW_B1 + 1, 128:])
    # lin2 consumes the two 128-lane halves directly (no concat needed)
    h2 = jnp.tanh(
        jnp.dot(h1a.astype(bf16), w_ref[_OFF_W2A:_OFF_W2A + 128, :], preferred_element_type=f32)
        + jnp.dot(h1b.astype(bf16), w_ref[_OFF_W2B:_OFF_W2B + 128, :], preferred_element_type=f32)
        + bias[_BROW_B2:_BROW_B2 + 1, :128])
    h3 = jnp.tanh(
        jnp.dot(h2.astype(bf16), w_ref[_OFF_W3:_OFF_W3 + 128, :], preferred_element_type=f32)
        + bias[_BROW_B3:_BROW_B3 + 1, :128])
    o_ref[...] = (
        jnp.dot(h3.astype(bf16), w_ref[_OFF_W4:_OFF_W4 + 128, :], preferred_element_type=f32)
        + bias[_BROW_B4:_BROW_B4 + 1, :128])


def _vmem_limit_bytes(*arrays, out_bytes=0):
    # Actual resident footprint with headroom for compiler scratch / relayouts.
    # Cap at 48 MiB: v7x has only 64 MiB physical VMEM per TensorCore, so never
    # request the whole thing (v5e/v6e have 128 MiB and could go toward ~100 MiB).
    total = sum(int(a.size) * a.dtype.itemsize for a in arrays) + out_bytes
    return int(min(48 << 20, max(4 * total + (4 << 20), 16 << 20)))


def fused_forward(adj, inv_deg, x_pad, pool_mat, w_slab, b_slab):
    b = pool_mat.shape[0]
    vmem_limit = _vmem_limit_bytes(adj, inv_deg, x_pad, pool_mat, w_slab, b_slab,
                                   out_bytes=b * N_CLS_PAD * 4)
    vmem_spec = pl.BlockSpec(memory_space=pltpu.MemorySpace.VMEM)
    return pl.pallas_call(
        _fused_forward_kernel,
        out_shape=jax.ShapeDtypeStruct((b, N_CLS_PAD), jnp.float32),
        in_specs=[vmem_spec] * 6,
        out_specs=vmem_spec,
        compiler_params=pltpu.CompilerParams(vmem_limit_bytes=vmem_limit),
    )(adj, inv_deg, x_pad, pool_mat, w_slab, b_slab)


# ---------------------------------------------------------------------------
# Parameter construction (PyTorch-default-style uniform init), packed into slabs
# ---------------------------------------------------------------------------
def _uniform(key, shape, fan_in):
    bound = 1.0 / jnp.sqrt(jnp.float32(fan_in))
    return jax.random.uniform(key, shape, jnp.float32, -bound, bound)


def _linear(key, f_in, f_out):
    kw, kb = jax.random.split(key)
    return _uniform(kw, (f_in, f_out), f_in), _uniform(kb, (1, f_out), f_in)


def _fold_bn(w, b, eps=1e-5):
    # eval-mode BatchNorm1d, default stats: gamma=1, beta=0, mean=0, var=1
    scale = (1.0 + eps) ** -0.5
    return w * scale, b * scale


def _pad_to(a, rows, cols):
    return jnp.zeros((rows, cols), a.dtype).at[:a.shape[0], :a.shape[1]].set(a)


def _sage_cat(key, f_in, f_in_pad):
    kl, kr, kb = jax.random.split(key, 3)
    wl = _uniform(kl, (f_in, HID), f_in)        # lin_l (aggregated neighbors, has bias)
    wr = _uniform(kr, (f_in, HID), f_in)        # lin_r (root, no bias)
    bl = _uniform(kb, (1, HID), f_in)
    wcat = jnp.concatenate([wl, wr], axis=1)    # [f_in, 128] = [W_l | W_r]
    return _pad_to(wcat, f_in_pad, 128), bl


def init_params(key):
    keys = jax.random.split(key, 8)

    wcat1, bl1 = _sage_cat(keys[0], F_IN, F_IN_PAD)
    wcat2, bl2 = _sage_cat(keys[1], HID, HID)
    wcat3, bl3 = _sage_cat(keys[2], HID, HID)

    w1, b1 = _fold_bn(*_linear(keys[3], HID, H1))
    w2, b2 = _fold_bn(*_linear(keys[4], H1, H2))
    w3, b3 = _fold_bn(*_linear(keys[5], H2, H2))
    w4, b4 = _linear(keys[6], H2, N_CLS)

    # Lane-dense padding (padded cols have zero weight/bias -> tanh(0)=0 -> exact).
    w1p, b1p = _pad_to(w1, HID, H1_PAD), _pad_to(b1, 1, H1_PAD)
    w2p, b2p = _pad_to(w2, H1_PAD, H2_PAD), _pad_to(b2, 1, H2_PAD)
    w3p, b3p = _pad_to(w3, H2_PAD, H2_PAD), _pad_to(b3, 1, H2_PAD)
    w4p, b4p = _pad_to(w4, H2_PAD, N_CLS_PAD), _pad_to(b4, 1, N_CLS_PAD)

    w_slab = jnp.concatenate(
        [wcat1,               # rows    0: 512
         wcat2,               # rows  512: 576
         wcat3,               # rows  576: 640
         w1p[:, :128],        # rows  640: 704
         w1p[:, 128:],        # rows  704: 768
         w2p[:128, :],        # rows  768: 896
         w2p[128:, :],        # rows  896:1024
         w3p,                 # rows 1024:1152
         w4p],                # rows 1152:1280
        axis=0).astype(jnp.bfloat16)
    assert w_slab.shape == (W_SLAB_ROWS, 128)

    b_slab = jnp.zeros((8, 256), jnp.float32)
    b_slab = b_slab.at[_BROW_SAGE1, :HID].set(bl1[0])
    b_slab = b_slab.at[_BROW_SAGE2, :HID].set(bl2[0])
    b_slab = b_slab.at[_BROW_SAGE3, :HID].set(bl3[0])
    b_slab = b_slab.at[_BROW_B1, :H1_PAD].set(b1p[0])
    b_slab = b_slab.at[_BROW_B2, :H2_PAD].set(b2p[0])
    b_slab = b_slab.at[_BROW_B3, :H2_PAD].set(b3p[0])
    b_slab = b_slab.at[_BROW_B4, :N_CLS_PAD].set(b4p[0])

    return {"w_slab": w_slab, "b_slab": b_slab}


# ---------------------------------------------------------------------------
# Glue: densify graph structure (scatter / compare ops stay in XLA), run kernel
# ---------------------------------------------------------------------------
def build_graph_operators(edge_index, num_nodes):
    src, dst = edge_index[0], edge_index[1]
    counts = jnp.zeros((num_nodes, num_nodes), jnp.float32).at[dst, src].add(1.0)
    deg = counts.sum(axis=1, keepdims=True)
    inv_deg = 1.0 / jnp.maximum(deg, 1.0)          # f32, exact mean-aggregation scale
    return counts.astype(jnp.bfloat16), inv_deg    # small integer counts exact in bf16


def build_pool_matrix(batch, num_graphs):
    onehot = (batch[None, :] == jnp.arange(num_graphs)[:, None]).astype(jnp.float32)
    cnt = onehot.sum(axis=1, keepdims=True)
    return onehot / jnp.maximum(cnt, 1.0)


@functools.partial(jax.jit, static_argnames=("num_graphs",))
def net_forward(params, x, edge_index, batch, num_graphs):
    n, f = x.shape
    adj, inv_deg = build_graph_operators(edge_index, n)
    pool = build_pool_matrix(batch, num_graphs)
    x_pad = jnp.zeros((n, F_IN_PAD), jnp.bfloat16).at[:, :f].set(x.astype(jnp.bfloat16))
    out = fused_forward(adj, inv_deg, x_pad, pool, params["w_slab"], params["b_slab"])
    return out[:, :N_CLS]   # strip lane padding back to the 80 real classes


if __name__ == "__main__":
    key = jax.random.PRNGKey(0)
    k_param, k_x, k_s0, k_d0, k_s1, k_d1, k_y = jax.random.split(key, 7)

    # Small synthetic "data" object: 2 graphs of 8 nodes each, 500-d node features.
    N, NUM_GRAPHS, E_PER_GRAPH = 16, 2, 16
    x = jax.random.uniform(k_x, (N, F_IN), jnp.float32)
    src0 = jax.random.randint(k_s0, (E_PER_GRAPH,), 0, 8)
    dst0 = jax.random.randint(k_d0, (E_PER_GRAPH,), 0, 8)
    src1 = jax.random.randint(k_s1, (E_PER_GRAPH,), 8, 16)
    dst1 = jax.random.randint(k_d1, (E_PER_GRAPH,), 8, 16)
    edge_index = jnp.stack([jnp.concatenate([src0, src1]),
                            jnp.concatenate([dst0, dst1])]).astype(jnp.int32)
    batch = jnp.concatenate([jnp.zeros(8, jnp.int32), jnp.ones(8, jnp.int32)])
    y = jax.random.randint(k_y, (NUM_GRAPHS,), 0, N_CLS)  # labels (unused in forward)

    params = init_params(k_param)

    out = net_forward(params, x, edge_index, batch, NUM_GRAPHS)
    out = jax.block_until_ready(out)
    assert out.shape == (NUM_GRAPHS, N_CLS) and out.dtype == jnp.float32
    assert bool(jnp.all(jnp.isfinite(out)))
    print("KERNEL_OK")
</pallas_src>

<mosaic_0001>
module attributes {stable_mosaic.version = 11 : i64} {
  func.func private @main(%arg0: i32) attributes {dimension_semantics = [#tpu.dimension_semantics<core_parallel>], iteration_bounds = array<i64: 2>, tpu.core_type = #tpu.core_type<sc_scalar_subcore>, window_params = []} {
    return
  }
}

module attributes {stable_mosaic.version = 11 : i64} {
  func.func private @main(%arg0: i32) attributes {dimension_semantics = [#tpu.dimension_semantics<core_parallel>], iteration_bounds = array<i64: 2>, tpu.core_type = #tpu.core_type<sc_scalar_subcore>, window_params = []} {
    return
  }
}

module attributes {stable_mosaic.version = 11 : i64} {
  func.func @_fused_forward_kernel(%arg0: memref<16x16xbf16, #tpu.memory_space<vmem>>, %arg1: memref<16x1xf32, #tpu.memory_space<vmem>>, %arg2: memref<16x512xbf16, #tpu.memory_space<vmem>>, %arg3: memref<2x16xf32, #tpu.memory_space<vmem>>, %arg4: memref<1280x128xbf16, #tpu.memory_space<vmem>>, %arg5: memref<8x256xf32, #tpu.memory_space<vmem>>, %arg6: memref<2x128xf32, #tpu.memory_space<vmem>>) attributes {dimension_semantics = [], scalar_prefetch = 0 : i64, scratch_operands = 0 : i64, tpu.core_type = #tpu.core_type<tc>} {
    %c0 = arith.constant 0 : index
    %c0_0 = arith.constant 0 : index
    %0 = vector.load %arg5[%c0, %c0_0] : memref<8x256xf32, #tpu.memory_space<vmem>>, vector<8x256xf32>
    %c0_1 = arith.constant 0 : index
    %c0_2 = arith.constant 0 : index
    %1 = vector.load %arg2[%c0_1, %c0_2] : memref<16x512xbf16, #tpu.memory_space<vmem>>, vector<16x512xbf16>
    %2 = arith.extf %1 : vector<16x512xbf16> to vector<16x512xf32>
    %3 = math.absf %2 : vector<16x512xf32>
    %cst = arith.constant dense<0.000000e+00> : vector<16xf32>
    %4 = vector.multi_reduction <add>, %3, %cst [1] : vector<16x512xf32> to vector<16xf32>
    %5 = vector.shape_cast %4 : vector<16xf32> to vector<16x1xf32>
    %cst_3 = arith.constant 9.99999996E-13 : f32
    %6 = vector.broadcast %cst_3 : f32 to vector<16x1xf32>
    %7 = arith.maximumf %5, %6 : vector<16x1xf32>
    %8 = tpu.reciprocal %7 {approx = true} : vector<16x1xf32> -> vector<16x1xf32>
    %9 = vector.broadcast %8 : vector<16x1xf32> to vector<16x512xf32>
    %10 = arith.mulf %2, %9 : vector<16x512xf32>
    %11 = arith.truncf %10 : vector<16x512xf32> to vector<16x512xbf16>
    %c0_4 = arith.constant 0 : index
    %c0_5 = arith.constant 0 : index
    %12 = vector.load %arg0[%c0_4, %c0_5] : memref<16x16xbf16, #tpu.memory_space<vmem>>, vector<16x16xbf16>
    %c0_6 = arith.constant 0 : index
    %c0_7 = arith.constant 0 : index
    %13 = vector.load %arg1[%c0_6, %c0_7] : memref<16x1xf32, #tpu.memory_space<vmem>>, vector<16x1xf32>
    %c0_8 = arith.constant 0 : index
    %c0_9 = arith.constant 0 : index
    %14 = vector.load %arg4[%c0_8, %c0_9] : memref<1280x128xbf16, #tpu.memory_space<vmem>>, vector<512x128xbf16>
    %cst_10 = arith.constant dense<0.000000e+00> : vector<16x128xf32>
    %15 = tpu.matmul %11, %14, %cst_10 {dimension_numbers = #tpu.dot_dimension_numbers<[1], [0], [0], [1], [0, 0, 1, 1], [], []>} : vector<16x512xbf16>, vector<512x128xbf16>, vector<16x128xf32> -> vector<16x128xf32>
    %16 = vector.extract_strided_slice %15 {offsets = [0, 0], sizes = [16, 64], strides = [1, 1]} : vector<16x128xf32> to vector<16x64xf32>
    %17 = vector.extract_strided_slice %15 {offsets = [0, 64], sizes = [16, 64], strides = [1, 1]} : vector<16x128xf32> to vector<16x64xf32>
    %18 = arith.truncf %16 : vector<16x64xf32> to vector<16x64xbf16>
    %cst_11 = arith.constant dense<0.000000e+00> : vector<16x64xf32>
    %19 = tpu.matmul %12, %18, %cst_11 {dimension_numbers = #tpu.dot_dimension_numbers<[1], [0], [0], [1], [0, 0, 1, 1], [], []>} : vector<16x16xbf16>, vector<16x64xbf16>, vector<16x64xf32> -> vector<16x64xf32>
    %20 = vector.broadcast %13 : vector<16x1xf32> to vector<16x64xf32>
    %21 = arith.mulf %19, %20 : vector<16x64xf32>
    %22 = arith.addf %21, %17 : vector<16x64xf32>
    %23 = vector.extract_strided_slice %0 {offsets = [0, 0], sizes = [1, 64], strides = [1, 1]} : vector<8x256xf32> to vector<1x64xf32>
    %24 = vector.broadcast %23 : vector<1x64xf32> to vector<16x64xf32>
    %25 = arith.addf %22, %24 : vector<16x64xf32>
    %26 = arith.truncf %25 : vector<16x64xf32> to vector<16x64xbf16>
    %c512 = arith.constant 512 : index
    %c0_12 = arith.constant 0 : index
    %27 = vector.load %arg4[%c512, %c0_12] : memref<1280x128xbf16, #tpu.memory_space<vmem>>, vector<64x128xbf16>
    %cst_13 = arith.constant dense<0.000000e+00> : vector<16x128xf32>
    %28 = tpu.matmul %26, %27, %cst_13 {dimension_numbers = #tpu.dot_dimension_numbers<[1], [0], [0], [1], [0, 0, 1, 1], [], []>} : vector<16x64xbf16>, vector<64x128xbf16>, vector<16x128xf32> -> vector<16x128xf32>
    %29 = vector.extract_strided_slice %28 {offsets = [0, 0], sizes = [16, 64], strides = [1, 1]} : vector<16x128xf32> to vector<16x64xf32>
    %30 = vector.extract_strided_slice %28 {offsets = [0, 64], sizes = [16, 64], strides = [1, 1]} : vector<16x128xf32> to vector<16x64xf32>
    %31 = arith.truncf %29 : vector<16x64xf32> to vector<16x64xbf16>
    %cst_14 = arith.constant dense<0.000000e+00> : vector<16x64xf32>
    %32 = tpu.matmul %12, %31, %cst_14 {dimension_numbers = #tpu.dot_dimension_numbers<[1], [0], [0], [1], [0, 0, 1, 1], [], []>} : vector<16x16xbf16>, vector<16x64xbf16>, vector<16x64xf32> -> vector<16x64xf32>
    %33 = vector.broadcast %13 : vector<16x1xf32> to vector<16x64xf32>
    %34 = arith.mulf %32, %33 : vector<16x64xf32>
    %35 = arith.addf %34, %30 : vector<16x64xf32>
    %36 = vector.extract_strided_slice %0 {offsets = [1, 0], sizes = [1, 64], strides = [1, 1]} : vector<8x256xf32> to vector<1x64xf32>
    %37 = vector.broadcast %36 : vector<1x64xf32> to vector<16x64xf32>
    %38 = arith.addf %35, %37 : vector<16x64xf32>
    %39 = arith.truncf %38 : vector<16x64xf32> to vector<16x64xbf16>
    %c576 = arith.constant 576 : index
    %c0_15 = arith.constant 0 : index
    %40 = vector.load %arg4[%c576, %c0_15] : memref<1280x128xbf16, #tpu.memory_space<vmem>>, vector<64x128xbf16>
    %cst_16 = arith.constant dense<0.000000e+00> : vector<16x128xf32>
    %41 = tpu.matmul %39, %40, %cst_16 {dimension_numbers = #tpu.dot_dimension_numbers<[1], [0], [0], [1], [0, 0, 1, 1], [], []>} : vector<16x64xbf16>, vector<64x128xbf16>, vector<16x128xf32> -> vector<16x128xf32>
    %42 = vector.extract_strided_slice %41 {offsets = [0, 0], sizes = [16, 64], strides = [1, 1]} : vector<16x128xf32> to vector<16x64xf32>
    %43 = vector.extract_strided_slice %41 {offsets = [0, 64], sizes = [16, 64], strides = [1, 1]} : vector<16x128xf32> to vector<16x64xf32>
    %44 = arith.truncf %42 : vector<16x64xf32> to vector<16x64xbf16>
    %cst_17 = arith.constant dense<0.000000e+00> : vector<16x64xf32>
    %45 = tpu.matmul %12, %44, %cst_17 {dimension_numbers = #tpu.dot_dimension_numbers<[1], [0], [0], [1], [0, 0, 1, 1], [], []>} : vector<16x16xbf16>, vector<16x64xbf16>, vector<16x64xf32> -> vector<16x64xf32>
    %46 = vector.broadcast %13 : vector<16x1xf32> to vector<16x64xf32>
    %47 = arith.mulf %45, %46 : vector<16x64xf32>
    %48 = arith.addf %47, %43 : vector<16x64xf32>
    %49 = vector.extract_strided_slice %0 {offsets = [2, 0], sizes = [1, 64], strides = [1, 1]} : vector<8x256xf32> to vector<1x64xf32>
    %50 = vector.broadcast %49 : vector<1x64xf32> to vector<16x64xf32>
    %51 = arith.addf %48, %50 : vector<16x64xf32>
    %c0_18 = arith.constant 0 : index
    %c0_19 = arith.constant 0 : index
    %52 = vector.load %arg3[%c0_18, %c0_19] : memref<2x16xf32, #tpu.memory_space<vmem>>, vector<2x16xf32>
    %cst_20 = arith.constant dense<0.000000e+00> : vector<2x64xf32>
    %53 = tpu.matmul %52, %51, %cst_20 {dimension_numbers = #tpu.dot_dimension_numbers<[1], [0], [0], [1], [0, 0, 1, 1], [], []>} : vector<2x16xf32>, vector<16x64xf32>, vector<2x64xf32> -> vector<2x64xf32>
    %54 = arith.truncf %53 : vector<2x64xf32> to vector<2x64xbf16>
    %c640 = arith.constant 640 : index
    %c0_21 = arith.constant 0 : index
    %55 = vector.load %arg4[%c640, %c0_21] : memref<1280x128xbf16, #tpu.memory_space<vmem>>, vector<64x128xbf16>
    %cst_22 = arith.constant dense<0.000000e+00> : vector<2x128xf32>
    %56 = tpu.matmul %54, %55, %cst_22 {dimension_numbers = #tpu.dot_dimension_numbers<[1], [0], [0], [1], [0, 0, 1, 1], [], []>} : vector<2x64xbf16>, vector<64x128xbf16>, vector<2x128xf32> -> vector<2x128xf32>
    %57 = vector.extract_strided_slice %0 {offsets = [3, 0], sizes = [1, 128], strides = [1, 1]} : vector<8x256xf32> to vector<1x128xf32>
    %58 = vector.broadcast %57 : vector<1x128xf32> to vector<2x128xf32>
    %59 = arith.addf %56, %58 : vector<2x128xf32>
    %60 = math.tanh %59 : vector<2x128xf32>
    %c704 = arith.constant 704 : index
    %c0_23 = arith.constant 0 : index
    %61 = vector.load %arg4[%c704, %c0_23] : memref<1280x128xbf16, #tpu.memory_space<vmem>>, vector<64x128xbf16>
    %cst_24 = arith.constant dense<0.000000e+00> : vector<2x128xf32>
    %62 = tpu.matmul %54, %61, %cst_24 {dimension_numbers = #tpu.dot_dimension_numbers<[1], [0], [0], [1], [0, 0, 1, 1], [], []>} : vector<2x64xbf16>, vector<64x128xbf16>, vector<2x128xf32> -> vector<2x128xf32>
    %63 = vector.extract_strided_slice %0 {offsets = [3, 128], sizes = [1, 128], strides = [1, 1]} : vector<8x256xf32> to vector<1x128xf32>
    %64 = vector.broadcast %63 : vector<1x128xf32> to vector<2x128xf32>
    %65 = arith.addf %62, %64 : vector<2x128xf32>
    %66 = math.tanh %65 : vector<2x128xf32>
    %67 = arith.truncf %60 : vector<2x128xf32> to vector<2x128xbf16>
    %c768 = arith.constant 768 : index
    %c0_25 = arith.constant 0 : index
    %68 = vector.load %arg4[%c768, %c0_25] : memref<1280x128xbf16, #tpu.memory_space<vmem>>, vector<128x128xbf16>
    %cst_26 = arith.constant dense<0.000000e+00> : vector<2x128xf32>
    %69 = tpu.matmul %67, %68, %cst_26 {dimension_numbers = #tpu.dot_dimension_numbers<[1], [0], [0], [1], [0, 0, 1, 1], [], []>} : vector<2x128xbf16>, vector<128x128xbf16>, vector<2x128xf32> -> vector<2x128xf32>
    %70 = arith.truncf %66 : vector<2x128xf32> to vector<2x128xbf16>
    %c896 = arith.constant 896 : index
    %c0_27 = arith.constant 0 : index
    %71 = vector.load %arg4[%c896, %c0_27] : memref<1280x128xbf16, #tpu.memory_space<vmem>>, vector<128x128xbf16>
    %cst_28 = arith.constant dense<0.000000e+00> : vector<2x128xf32>
    %72 = tpu.matmul %70, %71, %cst_28 {dimension_numbers = #tpu.dot_dimension_numbers<[1], [0], [0], [1], [0, 0, 1, 1], [], []>} : vector<2x128xbf16>, vector<128x128xbf16>, vector<2x128xf32> -> vector<2x128xf32>
    %73 = arith.addf %69, %72 : vector<2x128xf32>
    %74 = vector.extract_strided_slice %0 {offsets = [4, 0], sizes = [1, 128], strides = [1, 1]} : vector<8x256xf32> to vector<1x128xf32>
    %75 = vector.broadcast %74 : vector<1x128xf32> to vector<2x128xf32>
    %76 = arith.addf %73, %75 : vector<2x128xf32>
    %77 = math.tanh %76 : vector<2x128xf32>
    %78 = arith.truncf %77 : vector<2x128xf32> to vector<2x128xbf16>
    %c1024 = arith.constant 1024 : index
    %c0_29 = arith.constant 0 : index
    %79 = vector.load %arg4[%c1024, %c0_29] : memref<1280x128xbf16, #tpu.memory_space<vmem>>, vector<128x128xbf16>
    %cst_30 = arith.constant dense<0.000000e+00> : vector<2x128xf32>
    %80 = tpu.matmul %78, %79, %cst_30 {dimension_numbers = #tpu.dot_dimension_numbers<[1], [0], [0], [1], [0, 0, 1, 1], [], []>} : vector<2x128xbf16>, vector<128x128xbf16>, vector<2x128xf32> -> vector<2x128xf32>
    %81 = vector.extract_strided_slice %0 {offsets = [5, 0], sizes = [1, 128], strides = [1, 1]} : vector<8x256xf32> to vector<1x128xf32>
    %82 = vector.broadcast %81 : vector<1x128xf32> to vector<2x128xf32>
    %83 = arith.addf %80, %82 : vector<2x128xf32>
    %84 = math.tanh %83 : vector<2x128xf32>
    %85 = arith.truncf %84 : vector<2x128xf32> to vector<2x128xbf16>
    %c1152 = arith.constant 1152 : index
    %c0_31 = arith.constant 0 : index
    %86 = vector.load %arg4[%c1152, %c0_31] : memref<1280x128xbf16, #tpu.memory_space<vmem>>, vector<128x128xbf16>
    %cst_32 = arith.constant dense<0.000000e+00> : vector<2x128xf32>
    %87 = tpu.matmul %85, %86, %cst_32 {dimension_numbers = #tpu.dot_dimension_numbers<[1], [0], [0], [1], [0, 0, 1, 1], [], []>} : vector<2x128xbf16>, vector<128x128xbf16>, vector<2x128xf32> -> vector<2x128xf32>
    %88 = vector.extract_strided_slice %0 {offsets = [6, 0], sizes = [1, 128], strides = [1, 1]} : vector<8x256xf32> to vector<1x128xf32>
    %89 = vector.broadcast %88 : vector<1x128xf32> to vector<2x128xf32>
    %90 = arith.addf %87, %89 : vector<2x128xf32>
    %c0_33 = arith.constant 0 : index
    %c0_34 = arith.constant 0 : index
    %91 = vector.load %arg6[%c0_33, %c0_34] : memref<2x128xf32, #tpu.memory_space<vmem>>, vector<2x128xf32>
    tpu.vector_store %arg6[%c0_33, %c0_34], %90 {strides = array<i32>} : memref<2x128xf32, #tpu.memory_space<vmem>>, vector<2x128xf32>,
    return
  }
}

</mosaic_0001>

<llo_original>
// kernel: net_forward.1
$region0: #{net_forward.1}
  #allocation0 [shape = 'u32[]', space=smem, size = 0x4, offset = 0x4, fixed_abs, tag = 'smem constant byte address 0x4 - core index']
  #allocation1 [shape = 'u32[144,128]{1,0:T(1,128)}', space=vmem, size = 0x12000, scoped, tag = 'internal scratch']
  %s0 = inlined_call_operand.vmem [shape: bf16[16,16], index: 0, kind: input, shape index: {}]
  %s1 = inlined_call_operand.vmem [shape: f32[16,1], index: 1, kind: input, shape index: {}]
  %s2 = inlined_call_operand.vmem [shape: bf16[16,512], index: 2, kind: input, shape index: {}]
  %s3 = inlined_call_operand.vmem [shape: f32[2,16], index: 3, kind: input, shape index: {}]
  %s4 = inlined_call_operand.vmem [shape: bf16[1280,128], index: 4, kind: input, shape index: {}]
  %s5 = inlined_call_operand.vmem [shape: f32[8,256], index: 5, kind: input, shape index: {}]
  %s6 = inlined_call_operand.hbm [shape: f32[2,128], index: 6, kind: output, shape index: {}]
  %s7 = sld [smem:[#allocation0]]
  $region34: #{net_forward.1} parent=0
    _
  %s9 = ssub.s32 1, %s7
  %s10 = scalar_select 0, %s9, %s7
  $region1: #{net_forward.1} parent=0
    #allocation2 [shape = 'u8[1024]{0}', space=vmem, size = 0x400, scoped, tag = 'output window, operand 0, single buffered']
    #allocation3 [shape = 's32[1]{0}', space=sflag, size = 0x4, scoped, tag = 'scoped memory for net_forward.1']
    %11 = vsyncpa [#allocation3], 0
    // Predicated region
    $region2: #{net_forward.1} parent=1 // pred_check
      _
    $region3: #{net_forward.1} parent=1 // pred_check_branch
      %13 = sbr.rel (0) target = $region5
    $region4: #{net_forward.1} parent=1 // pred_region
      _
    $region5: #{net_forward.1} parent=1 // pred_fallthru
      _
    // Predicated region
    $region6: #{net_forward.1} parent=1 // pred_check
      _
    $region7: #{net_forward.1} parent=1 // pred_check_branch
      %15 = sbr.rel (0) target = $region9
    $region8: #{net_forward.1} parent=1 // pred_region
      _
    $region9: #{net_forward.1} parent=1 // pred_fallthru
      _
    // Predicated region
    $region10: #{net_forward.1} parent=1 // pred_check
      _
    $region11: #{net_forward.1} parent=1 // pred_check_branch
      %17 = sbr.rel (0) target = $region13
    $region12: #{net_forward.1} parent=1 // pred_region
      _
    $region13: #{net_forward.1} parent=1 // pred_fallthru
      _
    // Predicated region
    $region14: #{net_forward.1} parent=1 // pred_check
      _
    $region15: #{net_forward.1} parent=1 // pred_check_branch
      %19 = sbr.rel (0) target = $region17
    $region16: #{net_forward.1} parent=1 // pred_region
      _
    $region17: #{net_forward.1} parent=1 // pred_fallthru
      _
    // Predicated region
    $region18: #{net_forward.1} parent=1 // pred_check
      _
    $region19: #{net_forward.1} parent=1 // pred_check_branch
      %21 = sbr.rel (0) target = $region21
    $region20: #{net_forward.1} parent=1 // pred_region
      _
    $region21: #{net_forward.1} parent=1 // pred_fallthru
      _
    // Predicated region
    $region22: #{net_forward.1} parent=1 // pred_check
      _
    $region23: #{net_forward.1} parent=1 // pred_check_branch
      %23 = sbr.rel (0) target = $region25
    $region24: #{net_forward.1} parent=1 // pred_region
      _
    $region25: #{net_forward.1} parent=1 // pred_fallthru
      _
    %v25 = vld [vmem:[%s5] sm:$0xff]
    %v26 = vld [vmem:[%s5 + $0x8] sm:$0xff]
    %v27 = vld [vmem:[%s2] sm:$0xff]
    %v28 = vld [vmem:[%s2 + $0x8] sm:$0xff]
    %v29 = vld [vmem:[%s2 + $0x10] sm:$0xff]
    %v30 = vld [vmem:[%s2 + $0x18] sm:$0xff]
    %v31 = vunpack.c.l.bf16 %v27
    %v32 = vunpack.c.h.bf16 %v27
    %v33 = vunpack.c.l.bf16 %v28
    %v34 = vunpack.c.h.bf16 %v28
    %v35 = vunpack.c.l.bf16 %v29
    %v36 = vunpack.c.h.bf16 %v29
    %v37 = vunpack.c.l.bf16 %v30
    %v38 = vunpack.c.h.bf16 %v30
    %v39 = vand.u32 2147483647, %v31
    %v40 = vand.u32 2147483647, %v32
    %v41 = vand.u32 2147483647, %v33
    %v42 = vand.u32 2147483647, %v34
    %v43 = vand.u32 2147483647, %v35
    %v44 = vand.u32 2147483647, %v36
    %v45 = vand.u32 2147483647, %v37
    %v46 = vand.u32 2147483647, %v38
    %v47 = vadd.f32 %v39, %v40
    %v48 = vadd.f32 %v47, %v41
    %v49 = vadd.f32 %v48, %v42
    %50 = vadd.xlane.f32.xlu0 %v49
    %v51 = vpop.xlane.xlu0 %50
    %v52 = vadd.f32 %v43, %v44
    %v53 = vadd.f32 %v52, %v45
    %v54 = vadd.f32 %v53, %v46
    %55 = vadd.xlane.f32.xlu0 %v54
    %v56 = vpop.xlane.xlu0 %55
    %v57 = vmax.f32 %v51, 1e-12
    %v58 = vmax.f32 %v56, 1e-12
    %v59 = vrcp.pop %v57
    %v60 = vrcp.pop %v58
    %v61 = vmul.f32 %v31, %v59
    %v62 = vmul.f32 %v32, %v59
    %v63 = vmul.f32 %v33, %v59
    %v64 = vmul.f32 %v34, %v59
    %v65 = vmul.f32 %v35, %v60
    %v66 = vmul.f32 %v36, %v60
    %v67 = vmul.f32 %v37, %v60
    %v68 = vmul.f32 %v38, %v60
    %v69 = vpack.c.bf16 %v65, %v61
    %v70 = vpack.c.bf16 %v66, %v62
    %v71 = vpack.c.bf16 %v67, %v63
    %v72 = vpack.c.bf16 %v68, %v64
    %v73 = vld [vmem:[%s0] sm:$0xf]
    %v74 = vld [vmem:[%s0 + $0x4] sm:$0xf]
    %v75 = vld [vmem:[%s1] sm:$0xff]
    %v76 = vld [vmem:[%s1 + $0x8] sm:$0xff]
    %v77 = vld [vmem:[%s4] sm:$0xf]
    %v78 = vld [vmem:[%s4 + $0x4] sm:$0xf]
    %v79 = vld [vmem:[%s4 + $0x8] sm:$0xf]
    %v80 = vld [vmem:[%s4 + $0xc] sm:$0xf]
    %v81 = vld [vmem:[%s4 + $0x10] sm:$0xf]
    %v82 = vld [vmem:[%s4 + $0x14] sm:$0xf]
    %v83 = vld [vmem:[%s4 + $0x18] sm:$0xf]
    %v84 = vld [vmem:[%s4 + $0x1c] sm:$0xf]
    %v85 = vld [vmem:[%s4 + $0x20] sm:$0xf]
    %v86 = vld [vmem:[%s4 + $0x24] sm:$0xf]
    %v87 = vld [vmem:[%s4 + $0x28] sm:$0xf]
    %v88 = vld [vmem:[%s4 + $0x2c] sm:$0xf]
    %v89 = vld [vmem:[%s4 + $0x30] sm:$0xf]
    %v90 = vld [vmem:[%s4 + $0x34] sm:$0xf]
    %v91 = vld [vmem:[%s4 + $0x38] sm:$0xf]
    %v92 = vld [vmem:[%s4 + $0x3c] sm:$0xf]
    %v93 = vld [vmem:[%s4 + $0x40] sm:$0xf]
    %v94 = vld [vmem:[%s4 + $0x44] sm:$0xf]
    %v95 = vld [vmem:[%s4 + $0x48] sm:$0xf]
    %v96 = vld [vmem:[%s4 + $0x4c] sm:$0xf]
    %v97 = vld [vmem:[%s4 + $0x50] sm:$0xf]
    %v98 = vld [vmem:[%s4 + $0x54] sm:$0xf]
    %v99 = vld [vmem:[%s4 + $0x58] sm:$0xf]
    %v100 = vld [vmem:[%s4 + $0x5c] sm:$0xf]
    %v101 = vld [vmem:[%s4 + $0x60] sm:$0xf]
    %v102 = vld [vmem:[%s4 + $0x64] sm:$0xf]
    %v103 = vld [vmem:[%s4 + $0x68] sm:$0xf]
    %v104 = vld [vmem:[%s4 + $0x6c] sm:$0xf]
    %v105 = vld [vmem:[%s4 + $0x70] sm:$0xf]
    %v106 = vld [vmem:[%s4 + $0x74] sm:$0xf]
    %v107 = vld [vmem:[%s4 + $0x78] sm:$0xf]
    %v108 = vld [vmem:[%s4 + $0x7c] sm:$0xf]
    %v109 = vld [vmem:[%s4 + $0x80] sm:$0xf]
    %v110 = vld [vmem:[%s4 + $0x84] sm:$0xf]
    %v111 = vld [vmem:[%s4 + $0x88] sm:$0xf]
    %v112 = vld [vmem:[%s4 + $0x8c] sm:$0xf]
    %v113 = vld [vmem:[%s4 + $0x90] sm:$0xf]
    %v114 = vld [vmem:[%s4 + $0x94] sm:$0xf]
    %v115 = vld [vmem:[%s4 + $0x98] sm:$0xf]
    %v116 = vld [vmem:[%s4 + $0x9c] sm:$0xf]
    %v117 = vld [vmem:[%s4 + $0xa0] sm:$0xf]
    %v118 = vld [vmem:[%s4 + $0xa4] sm:$0xf]
    %v119 = vld [vmem:[%s4 + $0xa8] sm:$0xf]
    %v120 = vld [vmem:[%s4 + $0xac] sm:$0xf]
    %v121 = vld [vmem:[%s4 + $0xb0] sm:$0xf]
    %v122 = vld [vmem:[%s4 + $0xb4] sm:$0xf]
    %v123 = vld [vmem:[%s4 + $0xb8] sm:$0xf]
    %v124 = vld [vmem:[%s4 + $0xbc] sm:$0xf]
    %v125 = vld [vmem:[%s4 + $0xc0] sm:$0xf]
    %v126 = vld [vmem:[%s4 + $0xc4] sm:$0xf]
    %v127 = vld [vmem:[%s4 + $0xc8] sm:$0xf]
    %v128 = vld [vmem:[%s4 + $0xcc] sm:$0xf]
    %v129 = vld [vmem:[%s4 + $0xd0] sm:$0xf]
    %v130 = vld [vmem:[%s4 + $0xd4] sm:$0xf]
    %v131 = vld [vmem:[%s4 + $0xd8] sm:$0xf]
    %v132 = vld [vmem:[%s4 + $0xdc] sm:$0xf]
    %v133 = vld [vmem:[%s4 + $0xe0] sm:$0xf]
    %v134 = vld [vmem:[%s4 + $0xe4] sm:$0xf]
    %v135 = vld [vmem:[%s4 + $0xe8] sm:$0xf]
    %v136 = vld [vmem:[%s4 + $0xec] sm:$0xf]
    %v137 = vld [vmem:[%s4 + $0xf0] sm:$0xf]
    %v138 = vld [vmem:[%s4 + $0xf4] sm:$0xf]
    %v139 = vld [vmem:[%s4 + $0xf8] sm:$0xf]
    %v140 = vld [vmem:[%s4 + $0xfc] sm:$0xf]
    %v205 = vunpack.c.l.b16 %v77
    %v206 = vunpack.c.l.b16 %v78
    %v207 = vunpack.c.l.b16 %v79
    %v208 = vunpack.c.l.b16 %v80
    %v209 = vunpack.c.l.b16 %v81
    %v210 = vunpack.c.l.b16 %v82
    %v211 = vunpack.c.l.b16 %v83
    %v212 = vunpack.c.l.b16 %v84
    %v213 = vunpack.c.l.b16 %v85
    %v214 = vunpack.c.l.b16 %v86
    %v215 = vunpack.c.l.b16 %v87
    %v216 = vunpack.c.l.b16 %v88
    %v217 = vunpack.c.l.b16 %v89
    %v218 = vunpack.c.l.b16 %v90
    %v219 = vunpack.c.l.b16 %v91
    %v220 = vunpack.c.l.b16 %v92
    %v221 = vunpack.c.l.b16 %v93
    %v222 = vunpack.c.l.b16 %v94
    %v223 = vunpack.c.l.b16 %v95
    %v224 = vunpack.c.l.b16 %v96
    %v225 = vunpack.c.l.b16 %v97
    %v226 = vunpack.c.l.b16 %v98
    %v227 = vunpack.c.l.b16 %v99
    %v228 = vunpack.c.l.b16 %v100
    %v229 = vunpack.c.l.b16 %v101
    %v230 = vunpack.c.l.b16 %v102
    %v231 = vunpack.c.l.b16 %v103
    %v232 = vunpack.c.l.b16 %v104
    %v233 = vunpack.c.l.b16 %v105
    %v234 = vunpack.c.l.b16 %v106
    %v235 = vunpack.c.l.b16 %v107
    %v236 = vunpack.c.l.b16 %v108
    %v237 = vunpack.c.l.b16 %v109
    %v238 = vunpack.c.l.b16 %v110
    %v239 = vunpack.c.l.b16 %v111
    %v240 = vunpack.c.l.b16 %v112
    %v241 = vunpack.c.l.b16 %v113
    %v242 = vunpack.c.l.b16 %v114
    %v243 = vunpack.c.l.b16 %v115
    %v244 = vunpack.c.l.b16 %v116
    %v245 = vunpack.c.l.b16 %v117
    %v246 = vunpack.c.l.b16 %v118
    %v247 = vunpack.c.l.b16 %v119
    %v248 = vunpack.c.l.b16 %v120
    %v249 = vunpack.c.l.b16 %v121
    %v250 = vunpack.c.l.b16 %v122
    %v251 = vunpack.c.l.b16 %v123
    %v252 = vunpack.c.l.b16 %v124
    %v253 = vunpack.c.l.b16 %v125
    %v254 = vunpack.c.l.b16 %v126
    %v255 = vunpack.c.l.b16 %v127
    %v256 = vunpack.c.l.b16 %v128
    %v257 = vunpack.c.l.b16 %v129
    %v258 = vunpack.c.l.b16 %v130
    %v259 = vunpack.c.l.b16 %v131
    %v260 = vunpack.c.l.b16 %v132
    %v261 = vunpack.c.l.b16 %v133
    %v262 = vunpack.c.l.b16 %v134
    %v263 = vunpack.c.l.b16 %v135
    %v264 = vunpack.c.l.b16 %v136
    %v265 = vunpack.c.l.b16 %v137
    %v266 = vunpack.c.l.b16 %v138
    %v267 = vunpack.c.l.b16 %v139
    %v268 = vunpack.c.l.b16 %v140
    %v269 = vpack.c.b16 %v206, %v205
    %v270 = vpack.c.b16 %v208, %v207
    %v271 = vpack.c.b16 %v210, %v209
    %v272 = vpack.c.b16 %v212, %v211
    %v273 = vpack.c.b16 %v214, %v213
    %v274 = vpack.c.b16 %v216, %v215
    %v275 = vpack.c.b16 %v218, %v217
    %v276 = vpack.c.b16 %v220, %v219
    %v277 = vpack.c.b16 %v222, %v221
    %v278 = vpack.c.b16 %v224, %v223
    %v279 = vpack.c.b16 %v226, %v225
    %v280 = vpack.c.b16 %v228, %v227
    %v281 = vpack.c.b16 %v230, %v229
    %v282 = vpack.c.b16 %v232, %v231
    %v283 = vpack.c.b16 %v234, %v233
    %v284 = vpack.c.b16 %v236, %v235
    %v285 = vpack.c.b16 %v238, %v237
    %v286 = vpack.c.b16 %v240, %v239
    %v287 = vpack.c.b16 %v242, %v241
    %v288 = vpack.c.b16 %v244, %v243
    %v289 = vpack.c.b16 %v246, %v245
    %v290 = vpack.c.b16 %v248, %v247
    %v291 = vpack.c.b16 %v250, %v249
    %v292 = vpack.c.b16 %v252, %v251
    %v293 = vpack.c.b16 %v254, %v253
    %v294 = vpack.c.b16 %v256, %v255
    %v295 = vpack.c.b16 %v258, %v257
    %v296 = vpack.c.b16 %v260, %v259
    %v297 = vpack.c.b16 %v262, %v261
    %v298 = vpack.c.b16 %v264, %v263
    %v299 = vpack.c.b16 %v266, %v265
    %v300 = vpack.c.b16 %v268, %v267
    %333 = vmatprep.subr.bf16.mxu0 0
    %334 = vmatpush1.bf16.msra.mxu0 %v276
    %335 = vmatprep.subr.bf16.mxu0 0
    %336 = vmatpush1.bf16.msra.mxu0 %v275
    %337 = vmatprep.subr.bf16.mxu0 0
    %338 = vmatpush1.bf16.msra.mxu0 %v274
    %339 = vmatprep.subr.bf16.mxu0 0
    %340 = vmatpush1.bf16.msra.mxu0 %v273
    %341 = vmatprep.subr.bf16.mxu0 0
    %342 = vmatpush1.bf16.msra.mxu0 %v272
    %343 = vmatprep.subr.bf16.mxu0 0
    %344 = vmatpush1.bf16.msra.mxu0 %v271
    %345 = vmatprep.subr.bf16.mxu0 0
    %346 = vmatpush1.bf16.msra.mxu0 %v270
    %347 = vmatprep.subr.bf16.mxu0 0
    %348 = vmatpush1.bf16.msra.mxu0 %v269
    %349 = vmatprep.subr.bf16.mxu0 0
    %350 = vmatpush2.bf16.msra.mxu0 %v284
    %351 = vmatprep.subr.bf16.mxu0 0
    %352 = vmatpush2.bf16.msra.mxu0 %v283
    %353 = vmatprep.subr.bf16.mxu0 0
    %354 = vmatpush2.bf16.msra.mxu0 %v282
    %355 = vmatprep.subr.bf16.mxu0 0
    %356 = vmatpush2.bf16.msra.mxu0 %v281
    %357 = vmatprep.subr.bf16.mxu0 0
    %358 = vmatpush2.bf16.msra.mxu0 %v280
    %359 = vmatprep.subr.bf16.mxu0 0
    %360 = vmatpush2.bf16.msra.mxu0 %v279
    %361 = vmatprep.subr.bf16.mxu0 0
    %362 = vmatpush2.bf16.msra.mxu0 %v278
    %363 = vmatprep.subr.bf16.mxu0 0
    %364 = vmatpush2.bf16.msra.mxu0 %v277
    %365 = vmatprep.mubr.bf16.mxu0 %v70
    %366 = vmatmul.mubr.bf16.gmra.mxu0 %v69
    %v367 = vpop.f32.mrf.mxu0
    %v368 = vadd.f32 0.0, %v367
    %v369 = vpop.f32.mrf.mxu0
    %v370 = vpop.f32.mrf.mxu0
    %v371 = vadd.f32 0.0, %v370
    %v372 = vpop.f32.mrf.mxu0
    %373 = vdwg.mxu0
    %374 = vmatprep.subr.bf16.mxu0 0
    %375 = vmatpush1.bf16.msra.mxu0 %v292
    %376 = vmatprep.subr.bf16.mxu0 0
    %377 = vmatpush1.bf16.msra.mxu0 %v291
    %378 = vmatprep.subr.bf16.mxu0 0
    %379 = vmatpush1.bf16.msra.mxu0 %v290
    %380 = vmatprep.subr.bf16.mxu0 0
    %381 = vmatpush1.bf16.msra.mxu0 %v289
    %382 = vmatprep.subr.bf16.mxu0 0
    %383 = vmatpush1.bf16.msra.mxu0 %v288
    %384 = vmatprep.subr.bf16.mxu0 0
    %385 = vmatpush1.bf16.msra.mxu0 %v287
    %386 = vmatprep.subr.bf16.mxu0 0
    %387 = vmatpush1.bf16.msra.mxu0 %v286
    %388 = vmatprep.subr.bf16.mxu0 0
    %389 = vmatpush1.bf16.msra.mxu0 %v285
    %390 = vmatprep.subr.bf16.mxu0 0
    %391 = vmatpush2.bf16.msra.mxu0 %v300
    %392 = vmatprep.subr.bf16.mxu0 0
    %393 = vmatpush2.bf16.msra.mxu0 %v299
    %394 = vmatprep.subr.bf16.mxu0 0
    %395 = vmatpush2.bf16.msra.mxu0 %v298
    %396 = vmatprep.subr.bf16.mxu0 0
    %397 = vmatpush2.bf16.msra.mxu0 %v297
    %398 = vmatprep.subr.bf16.mxu0 0
    %399 = vmatpush2.bf16.msra.mxu0 %v296
    %400 = vmatprep.subr.bf16.mxu0 0
    %401 = vmatpush2.bf16.msra.mxu0 %v295
    %402 = vmatprep.subr.bf16.mxu0 0
    %403 = vmatpush2.bf16.msra.mxu0 %v294
    %404 = vmatprep.subr.bf16.mxu0 0
    %405 = vmatpush2.bf16.msra.mxu0 %v293
    %406 = vmatprep.mubr.bf16.mxu0 %v72
    %407 = vmatmul.mubr.bf16.gmra.mxu0 %v71
    %v408 = vpop.f32.mrf.mxu0
    %v409 = vadd.f32 %v368, %v408
    %v410 = vpop.f32.mrf.mxu0
    %v411 = vpop.f32.mrf.mxu0
    %v412 = vadd.f32 %v371, %v411
    %v413 = vpop.f32.mrf.mxu0
    %414 = vdwg.mxu0
    %v415 = vpack.c.bf16 %v412, %v409
    %v418 = vunpack.c.l.b16 %v73
    %v419 = vunpack.c.l.b16 %v74
    %v420 = vpack.c.b16 %v419, %v418
    %vm421 = vcmask 130048
    %v423 = vsel %vm421, %v420, 0
    %425 = vmatprep.subr.bf16.mxu0 0
    %426 = vmatpush1.bf16.msra.mxu0 0
    %427 = vmatprep.subr.bf16.mxu0 0
    %428 = vmatpush1.bf16.msra.mxu0 0
    %429 = vmatprep.subr.bf16.mxu0 0
    %430 = vmatpush1.bf16.msra.mxu0 0
    %431 = vmatprep.subr.bf16.mxu0 0
    %432 = vmatpush1.bf16.msra.mxu0 0
    %433 = vmatprep.subr.bf16.mxu0 0
    %434 = vmatpush1.bf16.msra.mxu0 0
    %435 = vmatprep.subr.bf16.mxu0 0
    %436 = vmatpush1.bf16.msra.mxu0 0
    %437 = vmatprep.subr.bf16.mxu0 0
    %438 = vmatpush1.bf16.msra.mxu0 0
    %439 = vmatprep.subr.bf16.mxu0 0
    %440 = vmatpush1.bf16.msra.mxu0 %v415
    %441 = vmatprep.subr.bf16.mxu0 0
    %442 = vmatpush2.bf16.msra.mxu0 0
    %443 = vmatprep.subr.bf16.mxu0 0
    %444 = vmatpush2.bf16.msra.mxu0 0
    %445 = vmatprep.subr.bf16.mxu0 0
    %446 = vmatpush2.bf16.msra.mxu0 0
    %447 = vmatprep.subr.bf16.mxu0 0
    %448 = vmatpush2.bf16.msra.mxu0 0
    %449 = vmatprep.subr.bf16.mxu0 0
    %450 = vmatpush2.bf16.msra.mxu0 0
    %451 = vmatprep.subr.bf16.mxu0 0
    %452 = vmatpush2.bf16.msra.mxu0 0
    %453 = vmatprep.subr.bf16.mxu0 0
    %454 = vmatpush2.bf16.msra.mxu0 0
    %455 = vmatprep.subr.bf16.mxu0 0
    %456 = vmatpush2.bf16.msra.mxu0 0
    %457 = vmatprep.mubr.bf16.mxu0 0
    %458 = vmatmul.mubr.bf16.gmra.mxu0 %v423
    %v459 = vpop.f32.mrf.mxu0
    %v460 = vadd.f32 0.0, %v459
    %v461 = vpop.f32.mrf.mxu0
    %v462 = vpop.f32.mrf.mxu0
    %v463 = vadd.f32 0.0, %v462
    %v464 = vpop.f32.mrf.mxu0
    %465 = vdwg.mxu0
    %467 = vset.pattern.permute.xlu0 0
    %468 = vperm.xlu0 %467, %v75
    %v469 = vpop.permute.xlu0 %468
    %472 = vset.pattern.permute.xlu0 0
    %473 = vperm.xlu0 %472, %v76
    %v474 = vpop.permute.xlu0 %473
    %v476 = vmul.f32 %v460, %v469
    %v477 = vmul.f32 %v463, %v474
    %480 = vrot.lane.b32.xlu0 %v409, 64
    %v481 = vpop.permute.xlu0 %480
    %482 = vrot.lane.b32.xlu0 %v412, 64
    %v483 = vpop.permute.xlu0 %482
    %v486 = vadd.f32 %v476, %v481
    %v487 = vadd.f32 %v477, %v483
    %v488 = vlaneseq
    %v489 = vshrl.u32 %v488, 7
    %v490 = vsub.s32 0, %v489
    %v491 = vrot.slane %v25, %v490
    %v492 = vadd.f32 %v486, %v491
    %v493 = vadd.f32 %v487, %v491
    %v494 = vpack.c.bf16 %v493, %v492
    %v495 = vld [vmem:[%s4 + $0x100] sm:$0xf]
    %v496 = vld [vmem:[%s4 + $0x104] sm:$0xf]
    %v497 = vld [vmem:[%s4 + $0x108] sm:$0xf]
    %v498 = vld [vmem:[%s4 + $0x10c] sm:$0xf]
    %v499 = vld [vmem:[%s4 + $0x110] sm:$0xf]
    %v500 = vld [vmem:[%s4 + $0x114] sm:$0xf]
    %v501 = vld [vmem:[%s4 + $0x118] sm:$0xf]
    %v502 = vld [vmem:[%s4 + $0x11c] sm:$0xf]
    %v511 = vunpack.c.l.b16 %v495
    %v512 = vunpack.c.l.b16 %v496
    %v513 = vunpack.c.l.b16 %v497
    %v514 = vunpack.c.l.b16 %v498
    %v515 = vunpack.c.l.b16 %v499
    %v516 = vunpack.c.l.b16 %v500
    %v517 = vunpack.c.l.b16 %v501
    %v518 = vunpack.c.l.b16 %v502
    %v519 = vpack.c.b16 %v512, %v511
    %v520 = vpack.c.b16 %v514, %v513
    %v521 = vpack.c.b16 %v516, %v515
    %v522 = vpack.c.b16 %v518, %v517
    %vm527 = vcmask 523264
    %v529 = vsel %vm527, %v494, 0
    %531 = vmatprep.subr.bf16.mxu0 0
    %532 = vmatpush1.bf16.msra.mxu0 0
    %533 = vmatprep.subr.bf16.mxu0 0
    %534 = vmatpush1.bf16.msra.mxu0 0
    %535 = vmatprep.subr.bf16.mxu0 0
    %536 = vmatpush1.bf16.msra.mxu0 0
    %537 = vmatprep.subr.bf16.mxu0 0
    %538 = vmatpush1.bf16.msra.mxu0 0
    %539 = vmatprep.subr.bf16.mxu0 0
    %540 = vmatpush1.bf16.msra.mxu0 %v522
    %541 = vmatprep.subr.bf16.mxu0 0
    %542 = vmatpush1.bf16.msra.mxu0 %v521
    %543 = vmatprep.subr.bf16.mxu0 0
    %544 = vmatpush1.bf16.msra.mxu0 %v520
    %545 = vmatprep.subr.bf16.mxu0 0
    %546 = vmatpush1.bf16.msra.mxu0 %v519
    %547 = vmatprep.subr.bf16.mxu0 0
    %548 = vmatpush2.bf16.msra.mxu0 0
    %549 = vmatprep.subr.bf16.mxu0 0
    %550 = vmatpush2.bf16.msra.mxu0 0
    %551 = vmatprep.subr.bf16.mxu0 0
    %552 = vmatpush2.bf16.msra.mxu0 0
    %553 = vmatprep.subr.bf16.mxu0 0
    %554 = vmatpush2.bf16.msra.mxu0 0
    %555 = vmatprep.subr.bf16.mxu0 0
    %556 = vmatpush2.bf16.msra.mxu0 0
    %557 = vmatprep.subr.bf16.mxu0 0
    %558 = vmatpush2.bf16.msra.mxu0 0
    %559 = vmatprep.subr.bf16.mxu0 0
    %560 = vmatpush2.bf16.msra.mxu0 0
    %561 = vmatprep.subr.bf16.mxu0 0
    %562 = vmatpush2.bf16.msra.mxu0 0
    %563 = vmatprep.mubr.bf16.mxu0 0
    %564 = vmatmul.mubr.bf16.gmra.mxu0 %v529
    %v565 = vpop.f32.mrf.mxu0
    %v566 = vadd.f32 0.0, %v565
    %v567 = vpop.f32.mrf.mxu0
    %v568 = vpop.f32.mrf.mxu0
    %v569 = vadd.f32 0.0, %v568
    %v570 = vpop.f32.mrf.mxu0
    %571 = vdwg.mxu0
    %v572 = vpack.c.bf16 %v569, %v566
    %573 = vmatprep.subr.bf16.mxu0 0
    %574 = vmatpush1.bf16.msra.mxu0 0
    %575 = vmatprep.subr.bf16.mxu0 0
    %576 = vmatpush1.bf16.msra.mxu0 0
    %577 = vmatprep.subr.bf16.mxu0 0
    %578 = vmatpush1.bf16.msra.mxu0 0
    %579 = vmatprep.subr.bf16.mxu0 0
    %580 = vmatpush1.bf16.msra.mxu0 0
    %581 = vmatprep.subr.bf16.mxu0 0
    %582 = vmatpush1.bf16.msra.mxu0 0
    %583 = vmatprep.subr.bf16.mxu0 0
    %584 = vmatpush1.bf16.msra.mxu0 0
    %585 = vmatprep.subr.bf16.mxu0 0
    %586 = vmatpush1.bf16.msra.mxu0 0
    %587 = vmatprep.subr.bf16.mxu0 0
    %588 = vmatpush1.bf16.msra.mxu0 %v572
    %589 = vmatprep.subr.bf16.mxu0 0
    %590 = vmatpush2.bf16.msra.mxu0 0
    %591 = vmatprep.subr.bf16.mxu0 0
    %592 = vmatpush2.bf16.msra.mxu0 0
    %593 = vmatprep.subr.bf16.mxu0 0
    %594 = vmatpush2.bf16.msra.mxu0 0
    %595 = vmatprep.subr.bf16.mxu0 0
    %596 = vmatpush2.bf16.msra.mxu0 0
    %597 = vmatprep.subr.bf16.mxu0 0
    %598 = vmatpush2.bf16.msra.mxu0 0
    %599 = vmatprep.subr.bf16.mxu0 0
    %600 = vmatpush2.bf16.msra.mxu0 0
    %601 = vmatprep.subr.bf16.mxu0 0
    %602 = vmatpush2.bf16.msra.mxu0 0
    %603 = vmatprep.subr.bf16.mxu0 0
    %604 = vmatpush2.bf16.msra.mxu0 0
    %605 = vmatprep.mubr.bf16.mxu0 0
    %606 = vmatmul.mubr.bf16.gmra.mxu0 %v423
    %v607 = vpop.f32.mrf.mxu0
    %v608 = vadd.f32 0.0, %v607
    %v609 = vpop.f32.mrf.mxu0
    %v610 = vpop.f32.mrf.mxu0
    %v611 = vadd.f32 0.0, %v610
    %v612 = vpop.f32.mrf.mxu0
    %613 = vdwg.mxu0
    %v614 = vmul.f32 %v608, %v469
    %v615 = vmul.f32 %v611, %v474
    %618 = vrot.lane.b32.xlu0 %v566, 64
    %v619 = vpop.permute.xlu0 %618
    %620 = vrot.lane.b32.xlu0 %v569, 64
    %v621 = vpop.permute.xlu0 %620
    %v624 = vadd.f32 %v614, %v619
    %v625 = vadd.f32 %v615, %v621
    %v626 = vlaneseq
    %v627 = vshrl.u32 %v626, 7
    %v628 = vsub.s32 1, %v627
    %v629 = vrot.slane %v25, %v628
    %v630 = vadd.f32 %v624, %v629
    %v631 = vadd.f32 %v625, %v629
    %v632 = vpack.c.bf16 %v631, %v630
    %v633 = vld [vmem:[%s4 + $0x120] sm:$0xf]
    %v634 = vld [vmem:[%s4 + $0x124] sm:$0xf]
    %v635 = vld [vmem:[%s4 + $0x128] sm:$0xf]
    %v636 = vld [vmem:[%s4 + $0x12c] sm:$0xf]
    %v637 = vld [vmem:[%s4 + $0x130] sm:$0xf]
    %v638 = vld [vmem:[%s4 + $0x134] sm:$0xf]
    %v639 = vld [vmem:[%s4 + $0x138] sm:$0xf]
    %v640 = vld [vmem:[%s4 + $0x13c] sm:$0xf]
    %v649 = vunpack.c.l.b16 %v633
    %v650 = vunpack.c.l.b16 %v634
    %v651 = vunpack.c.l.b16 %v635
    %v652 = vunpack.c.l.b16 %v636
    %v653 = vunpack.c.l.b16 %v637
    %v654 = vunpack.c.l.b16 %v638
    %v655 = vunpack.c.l.b16 %v639
    %v656 = vunpack.c.l.b16 %v640
    %v657 = vpack.c.b16 %v650, %v649
    %v658 = vpack.c.b16 %v652, %v651
    %v659 = vpack.c.b16 %v654, %v653
    %v660 = vpack.c.b16 %v656, %v655
    %v666 = vsel %vm527, %v632, 0
    %668 = vmatprep.subr.bf16.mxu0 0
    %669 = vmatpush1.bf16.msra.mxu0 0
    %670 = vmatprep.subr.bf16.mxu0 0
    %671 = vmatpush1.bf16.msra.mxu0 0
    %672 = vmatprep.subr.bf16.mxu0 0
    %673 = vmatpush1.bf16.msra.mxu0 0
    %674 = vmatprep.subr.bf16.mxu0 0
    %675 = vmatpush1.bf16.msra.mxu0 0
    %676 = vmatprep.subr.bf16.mxu0 0
    %677 = vmatpush1.bf16.msra.mxu0 %v660
    %678 = vmatprep.subr.bf16.mxu0 0
    %679 = vmatpush1.bf16.msra.mxu0 %v659
    %680 = vmatprep.subr.bf16.mxu0 0
    %681 = vmatpush1.bf16.msra.mxu0 %v658
    %682 = vmatprep.subr.bf16.mxu0 0
    %683 = vmatpush1.bf16.msra.mxu0 %v657
    %684 = vmatprep.subr.bf16.mxu0 0
    %685 = vmatpush2.bf16.msra.mxu0 0
    %686 = vmatprep.subr.bf16.mxu0 0
    %687 = vmatpush2.bf16.msra.mxu0 0
    %688 = vmatprep.subr.bf16.mxu0 0
    %689 = vmatpush2.bf16.msra.mxu0 0
    %690 = vmatprep.subr.bf16.mxu0 0
    %691 = vmatpush2.bf16.msra.mxu0 0
    %692 = vmatprep.subr.bf16.mxu0 0
    %693 = vmatpush2.bf16.msra.mxu0 0
    %694 = vmatprep.subr.bf16.mxu0 0
    %695 = vmatpush2.bf16.msra.mxu0 0
    %696 = vmatprep.subr.bf16.mxu0 0
    %697 = vmatpush2.bf16.msra.mxu0 0
    %698 = vmatprep.subr.bf16.mxu0 0
    %699 = vmatpush2.bf16.msra.mxu0 0
    %700 = vmatprep.mubr.bf16.mxu0 0
    %701 = vmatmul.mubr.bf16.gmra.mxu0 %v666
    %v702 = vpop.f32.mrf.mxu0
    %v703 = vadd.f32 0.0, %v702
    %v704 = vpop.f32.mrf.mxu0
    %v705 = vpop.f32.mrf.mxu0
    %v706 = vadd.f32 0.0, %v705
    %v707 = vpop.f32.mrf.mxu0
    %708 = vdwg.mxu0
    %v709 = vpack.c.bf16 %v706, %v703
    %710 = vmatprep.subr.bf16.mxu0 0
    %711 = vmatpush1.bf16.msra.mxu0 0
    %712 = vmatprep.subr.bf16.mxu0 0
    %713 = vmatpush1.bf16.msra.mxu0 0
    %714 = vmatprep.subr.bf16.mxu0 0
    %715 = vmatpush1.bf16.msra.mxu0 0
    %716 = vmatprep.subr.bf16.mxu0 0
    %717 = vmatpush1.bf16.msra.mxu0 0
    %718 = vmatprep.subr.bf16.mxu0 0
    %719 = vmatpush1.bf16.msra.mxu0 0
    %720 = vmatprep.subr.bf16.mxu0 0
    %721 = vmatpush1.bf16.msra.mxu0 0
    %722 = vmatprep.subr.bf16.mxu0 0
    %723 = vmatpush1.bf16.msra.mxu0 0
    %724 = vmatprep.subr.bf16.mxu0 0
    %725 = vmatpush1.bf16.msra.mxu0 %v709
    %726 = vmatprep.subr.bf16.mxu0 0
    %727 = vmatpush2.bf16.msra.mxu0 0
    %728 = vmatprep.subr.bf16.mxu0 0
    %729 = vmatpush2.bf16.msra.mxu0 0
    %730 = vmatprep.subr.bf16.mxu0 0
    %731 = vmatpush2.bf16.msra.mxu0 0
    %732 = vmatprep.subr.bf16.mxu0 0
    %733 = vmatpush2.bf16.msra.mxu0 0
    %734 = vmatprep.subr.bf16.mxu0 0
    %735 = vmatpush2.bf16.msra.mxu0 0
    %736 = vmatprep.subr.bf16.mxu0 0
    %737 = vmatpush2.bf16.msra.mxu0 0
    %738 = vmatprep.subr.bf16.mxu0 0
    %739 = vmatpush2.bf16.msra.mxu0 0
    %740 = vmatprep.subr.bf16.mxu0 0
    %741 = vmatpush2.bf16.msra.mxu0 0
    %742 = vmatprep.mubr.bf16.mxu0 0
    %743 = vmatmul.mubr.bf16.gmra.mxu0 %v423
    %v744 = vpop.f32.mrf.mxu0
    %v745 = vadd.f32 0.0, %v744
    %v746 = vpop.f32.mrf.mxu0
    %v747 = vpop.f32.mrf.mxu0
    %v748 = vadd.f32 0.0, %v747
    %v749 = vpop.f32.mrf.mxu0
    %750 = vdwg.mxu0
    %v751 = vmul.f32 %v745, %v469
    %v752 = vmul.f32 %v748, %v474
    %755 = vrot.lane.b32.xlu0 %v703, 64
    %v756 = vpop.permute.xlu0 %755
    %757 = vrot.lane.b32.xlu0 %v706, 64
    %v758 = vpop.permute.xlu0 %757
    %v761 = vadd.f32 %v751, %v756
    %v762 = vadd.f32 %v752, %v758
    %v763 = vlaneseq
    %v764 = vshrl.u32 %v763, 7
    %v765 = vsub.s32 2, %v764
    %v766 = vrot.slane %v25, %v765
    %v767 = vadd.f32 %v761, %v766
    %v768 = vadd.f32 %v762, %v766
    %v769 = vld [vmem:[%s3] sm:$0x3]
    %v771 = vsel %vm421, %v769, 0
    %773 = vmatprep.subr.mxu0 0.0
    %774 = vmatpush1.msra.mxu0 0.0
    %775 = vmatprep.subr.mxu0 0.0
    %776 = vmatpush1.msra.mxu0 0.0
    %777 = vmatprep.subr.mxu0 0.0
    %778 = vmatpush1.msra.mxu0 0.0
    %779 = vmatprep.subr.mxu0 0.0
    %780 = vmatpush1.msra.mxu0 0.0
    %781 = vmatprep.subr.mxu0 0.0
    %782 = vmatpush1.msra.mxu0 0.0
    %783 = vmatprep.subr.mxu0 0.0
    %784 = vmatpush1.msra.mxu0 0.0
    %785 = vmatprep.subr.mxu0 0.0
    %786 = vmatpush1.msra.mxu0 0.0
    %787 = vmatprep.subr.mxu0 0.0
    %788 = vmatpush1.msra.mxu0 0.0
    %789 = vmatprep.subr.mxu0 0.0
    %790 = vmatpush1.msra.mxu0 0.0
    %791 = vmatprep.subr.mxu0 0.0
    %792 = vmatpush1.msra.mxu0 0.0
    %793 = vmatprep.subr.mxu0 0.0
    %794 = vmatpush1.msra.mxu0 0.0
    %795 = vmatprep.subr.mxu0 0.0
    %796 = vmatpush1.msra.mxu0 0.0
    %797 = vmatprep.subr.mxu0 0.0
    %798 = vmatpush1.msra.mxu0 0.0
    %799 = vmatprep.subr.mxu0 0.0
    %800 = vmatpush1.msra.mxu0 0.0
    %801 = vmatprep.subr.mxu0 0.0
    %802 = vmatpush1.msra.mxu0 %v768
    %803 = vmatprep.subr.mxu0 0.0
    %804 = vmatpush1.msra.mxu0 %v767
    %805 = vmatprep.subr.mxu0 0.0
    %806 = vmatpush2.msra.mxu0 0.0
    %807 = vmatprep.subr.mxu0 0.0
    %808 = vmatpush2.msra.mxu0 0.0
    %809 = vmatprep.subr.mxu0 0.0
    %810 = vmatpush2.msra.mxu0 0.0
    %811 = vmatprep.subr.mxu0 0.0
    %812 = vmatpush2.msra.mxu0 0.0
    %813 = vmatprep.subr.mxu0 0.0
    %814 = vmatpush2.msra.mxu0 0.0
    %815 = vmatprep.subr.mxu0 0.0
    %816 = vmatpush2.msra.mxu0 0.0
    %817 = vmatprep.subr.mxu0 0.0
    %818 = vmatpush2.msra.mxu0 0.0
    %819 = vmatprep.subr.mxu0 0.0
    %820 = vmatpush2.msra.mxu0 0.0
    %821 = vmatprep.subr.mxu0 0.0
    %822 = vmatpush2.msra.mxu0 0.0
    %823 = vmatprep.subr.mxu0 0.0
    %824 = vmatpush2.msra.mxu0 0.0
    %825 = vmatprep.subr.mxu0 0.0
    %826 = vmatpush2.msra.mxu0 0.0
    %827 = vmatprep.subr.mxu0 0.0
    %828 = vmatpush2.msra.mxu0 0.0
    %829 = vmatprep.subr.mxu0 0.0
    %830 = vmatpush2.msra.mxu0 0.0
    %831 = vmatprep.subr.mxu0 0.0
    %832 = vmatpush2.msra.mxu0 0.0
    %833 = vmatprep.subr.mxu0 0.0
    %834 = vmatpush2.msra.mxu0 0.0
    %835 = vmatprep.subr.mxu0 0.0
    %836 = vmatpush2.msra.mxu0 0.0
    %837 = vmatprep.mubr.f32.mxu0 0.0
    %838 = vmatmul.mubr.f32.gmra.mxu0 %v771
    %v839 = vpop.f32.mrf.mxu0
    %v840 = vadd.f32 0.0, %v839
    %v841 = vpop.f32.mrf.mxu0
    %842 = vdwg.mxu0
    %v843 = vpack.c.bf16 %v840, %v840
    %v844 = vld [vmem:[%s4 + $0x140] sm:$0xf]
    %v845 = vld [vmem:[%s4 + $0x144] sm:$0xf]
    %v846 = vld [vmem:[%s4 + $0x148] sm:$0xf]
    %v847 = vld [vmem:[%s4 + $0x14c] sm:$0xf]
    %v848 = vld [vmem:[%s4 + $0x150] sm:$0xf]
    %v849 = vld [vmem:[%s4 + $0x154] sm:$0xf]
    %v850 = vld [vmem:[%s4 + $0x158] sm:$0xf]
    %v851 = vld [vmem:[%s4 + $0x15c] sm:$0xf]
    %v852 = vlaneseq
    %v853 = vshrl.u32 %v852, 7
    %v854 = vsub.s32 3, %v853
    %v855 = vrot.slane %v25, %v854
    %v864 = vunpack.c.l.b16 %v844
    %v865 = vunpack.c.l.b16 %v845
    %v866 = vunpack.c.l.b16 %v846
    %v867 = vunpack.c.l.b16 %v847
    %v868 = vunpack.c.l.b16 %v848
    %v869 = vunpack.c.l.b16 %v849
    %v870 = vunpack.c.l.b16 %v850
    %v871 = vunpack.c.l.b16 %v851
    %v872 = vpack.c.b16 %v865, %v864
    %v873 = vpack.c.b16 %v867, %v866
    %v874 = vpack.c.b16 %v869, %v868
    %v875 = vpack.c.b16 %v871, %v870
    %v881 = vsel %vm527, %v843, 0
    %883 = vmatprep.subr.bf16.mxu0 0
    %884 = vmatpush1.bf16.msra.mxu0 0
    %885 = vmatprep.subr.bf16.mxu0 0
    %886 = vmatpush1.bf16.msra.mxu0 0
    %887 = vmatprep.subr.bf16.mxu0 0
    %888 = vmatpush1.bf16.msra.mxu0 0
    %889 = vmatprep.subr.bf16.mxu0 0
    %890 = vmatpush1.bf16.msra.mxu0 0
    %891 = vmatprep.subr.bf16.mxu0 0
    %892 = vmatpush1.bf16.msra.mxu0 %v875
    %893 = vmatprep.subr.bf16.mxu0 0
    %894 = vmatpush1.bf16.msra.mxu0 %v874
    %895 = vmatprep.subr.bf16.mxu0 0
    %896 = vmatpush1.bf16.msra.mxu0 %v873
    %897 = vmatprep.subr.bf16.mxu0 0
    %898 = vmatpush1.bf16.msra.mxu0 %v872
    %899 = vmatprep.subr.bf16.mxu0 0
    %900 = vmatpush2.bf16.msra.mxu0 0
    %901 = vmatprep.subr.bf16.mxu0 0
    %902 = vmatpush2.bf16.msra.mxu0 0
    %903 = vmatprep.subr.bf16.mxu0 0
    %904 = vmatpush2.bf16.msra.mxu0 0
    %905 = vmatprep.subr.bf16.mxu0 0
    %906 = vmatpush2.bf16.msra.mxu0 0
    %907 = vmatprep.subr.bf16.mxu0 0
    %908 = vmatpush2.bf16.msra.mxu0 0
    %909 = vmatprep.subr.bf16.mxu0 0
    %910 = vmatpush2.bf16.msra.mxu0 0
    %911 = vmatprep.subr.bf16.mxu0 0
    %912 = vmatpush2.bf16.msra.mxu0 0
    %913 = vmatprep.subr.bf16.mxu0 0
    %914 = vmatpush2.bf16.msra.mxu0 0
    %915 = vmatprep.mubr.bf16.mxu0 0
    %916 = vmatmul.mubr.bf16.gmra.mxu0 %v881
    %v917 = vpop.f32.mrf.mxu0
    %v918 = vadd.f32 %v855, %v917
    %v919 = vpop.f32.mrf.mxu0
    %v920 = vpop.f32.mrf.mxu0
    %v921 = vpop.f32.mrf.mxu0
    %922 = vdwg.mxu0
    %v923 = vtanh.pop %v918
    %v924 = vld [vmem:[%s4 + $0x160] sm:$0xf]
    %v925 = vld [vmem:[%s4 + $0x164] sm:$0xf]
    %v926 = vld [vmem:[%s4 + $0x168] sm:$0xf]
    %v927 = vld [vmem:[%s4 + $0x16c] sm:$0xf]
    %v928 = vld [vmem:[%s4 + $0x170] sm:$0xf]
    %v929 = vld [vmem:[%s4 + $0x174] sm:$0xf]
    %v930 = vld [vmem:[%s4 + $0x178] sm:$0xf]
    %v931 = vld [vmem:[%s4 + $0x17c] sm:$0xf]
    %v932 = vlaneseq
    %v933 = vshrl.u32 %v932, 7
    %v934 = vsub.s32 3, %v933
    %v935 = vrot.slane %v26, %v934
    %v944 = vunpack.c.l.b16 %v924
    %v945 = vunpack.c.l.b16 %v925
    %v946 = vunpack.c.l.b16 %v926
    %v947 = vunpack.c.l.b16 %v927
    %v948 = vunpack.c.l.b16 %v928
    %v949 = vunpack.c.l.b16 %v929
    %v950 = vunpack.c.l.b16 %v930
    %v951 = vunpack.c.l.b16 %v931
    %v952 = vpack.c.b16 %v945, %v944
    %v953 = vpack.c.b16 %v947, %v946
    %v954 = vpack.c.b16 %v949, %v948
    %v955 = vpack.c.b16 %v951, %v950
    %960 = vmatprep.subr.bf16.mxu0 0
    %961 = vmatpush1.bf16.msra.mxu0 0
    %962 = vmatprep.subr.bf16.mxu0 0
    %963 = vmatpush1.bf16.msra.mxu0 0
    %964 = vmatprep.subr.bf16.mxu0 0
    %965 = vmatpush1.bf16.msra.mxu0 0
    %966 = vmatprep.subr.bf16.mxu0 0
    %967 = vmatpush1.bf16.msra.mxu0 0
    %968 = vmatprep.subr.bf16.mxu0 0
    %969 = vmatpush1.bf16.msra.mxu0 %v955
    %970 = vmatprep.subr.bf16.mxu0 0
    %971 = vmatpush1.bf16.msra.mxu0 %v954
    %972 = vmatprep.subr.bf16.mxu0 0
    %973 = vmatpush1.bf16.msra.mxu0 %v953
    %974 = vmatprep.subr.bf16.mxu0 0
    %975 = vmatpush1.bf16.msra.mxu0 %v952
    %976 = vmatprep.subr.bf16.mxu0 0
    %977 = vmatpush2.bf16.msra.mxu0 0
    %978 = vmatprep.subr.bf16.mxu0 0
    %979 = vmatpush2.bf16.msra.mxu0 0
    %980 = vmatprep.subr.bf16.mxu0 0
    %981 = vmatpush2.bf16.msra.mxu0 0
    %982 = vmatprep.subr.bf16.mxu0 0
    %983 = vmatpush2.bf16.msra.mxu0 0
    %984 = vmatprep.subr.bf16.mxu0 0
    %985 = vmatpush2.bf16.msra.mxu0 0
    %986 = vmatprep.subr.bf16.mxu0 0
    %987 = vmatpush2.bf16.msra.mxu0 0
    %988 = vmatprep.subr.bf16.mxu0 0
    %989 = vmatpush2.bf16.msra.mxu0 0
    %990 = vmatprep.subr.bf16.mxu0 0
    %991 = vmatpush2.bf16.msra.mxu0 0
    %992 = vmatprep.mubr.bf16.mxu0 0
    %993 = vmatmul.mubr.bf16.gmra.mxu0 %v881
    %v994 = vpop.f32.mrf.mxu0
    %v995 = vadd.f32 %v935, %v994
    %v996 = vpop.f32.mrf.mxu0
    %v997 = vpop.f32.mrf.mxu0
    %v998 = vpop.f32.mrf.mxu0
    %999 = vdwg.mxu0
    %v1000 = vtanh.pop %v995
    %v1001 = vpack.c.bf16 %v923, %v923
    %v1002 = vld [vmem:[%s4 + $0x180] sm:$0xf]
    %v1003 = vld [vmem:[%s4 + $0x184] sm:$0xf]
    %v1004 = vld [vmem:[%s4 + $0x188] sm:$0xf]
    %v1005 = vld [vmem:[%s4 + $0x18c] sm:$0xf]
    %v1006 = vld [vmem:[%s4 + $0x190] sm:$0xf]
    %v1007 = vld [vmem:[%s4 + $0x194] sm:$0xf]
    %v1008 = vld [vmem:[%s4 + $0x198] sm:$0xf]
    %v1009 = vld [vmem:[%s4 + $0x19c] sm:$0xf]
    %v1010 = vld [vmem:[%s4 + $0x1a0] sm:$0xf]
    %v1011 = vld [vmem:[%s4 + $0x1a4] sm:$0xf]
    %v1012 = vld [vmem:[%s4 + $0x1a8] sm:$0xf]
    %v1013 = vld [vmem:[%s4 + $0x1ac] sm:$0xf]
    %v1014 = vld [vmem:[%s4 + $0x1b0] sm:$0xf]
    %v1015 = vld [vmem:[%s4 + $0x1b4] sm:$0xf]
    %v1016 = vld [vmem:[%s4 + $0x1b8] sm:$0xf]
    %v1017 = vld [vmem:[%s4 + $0x1bc] sm:$0xf]
    %v1018 = vpack.c.bf16 %v1000, %v1000
    %v1019 = vld [vmem:[%s4 + $0x1c0] sm:$0xf]
    %v1020 = vld [vmem:[%s4 + $0x1c4] sm:$0xf]
    %v1021 = vld [vmem:[%s4 + $0x1c8] sm:$0xf]
    %v1022 = vld [vmem:[%s4 + $0x1cc] sm:$0xf]
    %v1023 = vld [vmem:[%s4 + $0x1d0] sm:$0xf]
    %v1024 = vld [vmem:[%s4 + $0x1d4] sm:$0xf]
    %v1025 = vld [vmem:[%s4 + $0x1d8] sm:$0xf]
    %v1026 = vld [vmem:[%s4 + $0x1dc] sm:$0xf]
    %v1027 = vld [vmem:[%s4 + $0x1e0] sm:$0xf]
    %v1028 = vld [vmem:[%s4 + $0x1e4] sm:$0xf]
    %v1029 = vld [vmem:[%s4 + $0x1e8] sm:$0xf]
    %v1030 = vld [vmem:[%s4 + $0x1ec] sm:$0xf]
    %v1031 = vld [vmem:[%s4 + $0x1f0] sm:$0xf]
    %v1032 = vld [vmem:[%s4 + $0x1f4] sm:$0xf]
    %v1033 = vld [vmem:[%s4 + $0x1f8] sm:$0xf]
    %v1034 = vld [vmem:[%s4 + $0x1fc] sm:$0xf]
    %v1051 = vunpack.c.l.b16 %v1019
    %v1052 = vunpack.c.l.b16 %v1020
    %v1053 = vunpack.c.l.b16 %v1021
    %v1054 = vunpack.c.l.b16 %v1022
    %v1055 = vunpack.c.l.b16 %v1023
    %v1056 = vunpack.c.l.b16 %v1024
    %v1057 = vunpack.c.l.b16 %v1025
    %v1058 = vunpack.c.l.b16 %v1026
    %v1059 = vunpack.c.l.b16 %v1027
    %v1060 = vunpack.c.l.b16 %v1028
    %v1061 = vunpack.c.l.b16 %v1029
    %v1062 = vunpack.c.l.b16 %v1030
    %v1063 = vunpack.c.l.b16 %v1031
    %v1064 = vunpack.c.l.b16 %v1032
    %v1065 = vunpack.c.l.b16 %v1033
    %v1066 = vunpack.c.l.b16 %v1034
    %v1067 = vpack.c.b16 %v1052, %v1051
    %v1068 = vpack.c.b16 %v1054, %v1053
    %v1069 = vpack.c.b16 %v1056, %v1055
    %v1070 = vpack.c.b16 %v1058, %v1057
    %v1071 = vpack.c.b16 %v1060, %v1059
    %v1072 = vpack.c.b16 %v1062, %v1061
    %v1073 = vpack.c.b16 %v1064, %v1063
    %v1074 = vpack.c.b16 %v1066, %v1065
    %1083 = vmatprep.subr.bf16.mxu0 0
    %1084 = vmatpush1.bf16.msra.mxu0 %v1074
    %1085 = vmatprep.subr.bf16.mxu0 0
    %1086 = vmatpush1.bf16.msra.mxu0 %v1073
    %1087 = vmatprep.subr.bf16.mxu0 0
    %1088 = vmatpush1.bf16.msra.mxu0 %v1072
    %1089 = vmatprep.subr.bf16.mxu0 0
    %1090 = vmatpush1.bf16.msra.mxu0 %v1071
    %1091 = vmatprep.subr.bf16.mxu0 0
    %1092 = vmatpush1.bf16.msra.mxu0 %v1070
    %1093 = vmatprep.subr.bf16.mxu0 0
    %1094 = vmatpush1.bf16.msra.mxu0 %v1069
    %1095 = vmatprep.subr.bf16.mxu0 0
    %1096 = vmatpush1.bf16.msra.mxu0 %v1068
    %1097 = vmatprep.subr.bf16.mxu0 0
    %1098 = vmatpush1.bf16.msra.mxu0 %v1067
    %1099 = vmatprep.subr.bf16.mxu0 0
    %1100 = vmatpush2.bf16.msra.mxu0 0
    %1101 = vmatprep.subr.bf16.mxu0 0
    %1102 = vmatpush2.bf16.msra.mxu0 0
    %1103 = vmatprep.subr.bf16.mxu0 0
    %1104 = vmatpush2.bf16.msra.mxu0 0
    %1105 = vmatprep.subr.bf16.mxu0 0
    %1106 = vmatpush2.bf16.msra.mxu0 0
    %1107 = vmatprep.subr.bf16.mxu0 0
    %1108 = vmatpush2.bf16.msra.mxu0 0
    %1109 = vmatprep.subr.bf16.mxu0 0
    %1110 = vmatpush2.bf16.msra.mxu0 0
    %1111 = vmatprep.subr.bf16.mxu0 0
    %1112 = vmatpush2.bf16.msra.mxu0 0
    %1113 = vmatprep.subr.bf16.mxu0 0
    %1114 = vmatpush2.bf16.msra.mxu0 0
    %1115 = vmatprep.mubr.bf16.mxu0 0
    %1116 = vmatmul.mubr.bf16.gmra.mxu0 %v1018
    %v1117 = vpop.f32.mrf.mxu0
    %v1118 = vadd.f32 0.0, %v1117
    %v1119 = vpop.f32.mrf.mxu0
    %v1120 = vpop.f32.mrf.mxu0
    %v1121 = vpop.f32.mrf.mxu0
    %1122 = vdwg.mxu0
    %v1139 = vunpack.c.l.b16 %v1002
    %v1140 = vunpack.c.l.b16 %v1003
    %v1141 = vunpack.c.l.b16 %v1004
    %v1142 = vunpack.c.l.b16 %v1005
    %v1143 = vunpack.c.l.b16 %v1006
    %v1144 = vunpack.c.l.b16 %v1007
    %v1145 = vunpack.c.l.b16 %v1008
    %v1146 = vunpack.c.l.b16 %v1009
    %v1147 = vunpack.c.l.b16 %v1010
    %v1148 = vunpack.c.l.b16 %v1011
    %v1149 = vunpack.c.l.b16 %v1012
    %v1150 = vunpack.c.l.b16 %v1013
    %v1151 = vunpack.c.l.b16 %v1014
    %v1152 = vunpack.c.l.b16 %v1015
    %v1153 = vunpack.c.l.b16 %v1016
    %v1154 = vunpack.c.l.b16 %v1017
    %v1155 = vpack.c.b16 %v1140, %v1139
    %v1156 = vpack.c.b16 %v1142, %v1141
    %v1157 = vpack.c.b16 %v1144, %v1143
    %v1158 = vpack.c.b16 %v1146, %v1145
    %v1159 = vpack.c.b16 %v1148, %v1147
    %v1160 = vpack.c.b16 %v1150, %v1149
    %v1161 = vpack.c.b16 %v1152, %v1151
    %v1162 = vpack.c.b16 %v1154, %v1153
    %1171 = vmatprep.subr.bf16.mxu0 0
    %1172 = vmatpush1.bf16.msra.mxu0 %v1162
    %1173 = vmatprep.subr.bf16.mxu0 0
    %1174 = vmatpush1.bf16.msra.mxu0 %v1161
    %1175 = vmatprep.subr.bf16.mxu0 0
    %1176 = vmatpush1.bf16.msra.mxu0 %v1160
    %1177 = vmatprep.subr.bf16.mxu0 0
    %1178 = vmatpush1.bf16.msra.mxu0 %v1159
    %1179 = vmatprep.subr.bf16.mxu0 0
    %1180 = vmatpush1.bf16.msra.mxu0 %v1158
    %1181 = vmatprep.subr.bf16.mxu0 0
    %1182 = vmatpush1.bf16.msra.mxu0 %v1157
    %1183 = vmatprep.subr.bf16.mxu0 0
    %1184 = vmatpush1.bf16.msra.mxu0 %v1156
    %1185 = vmatprep.subr.bf16.mxu0 0
    %1186 = vmatpush1.bf16.msra.mxu0 %v1155
    %1187 = vmatprep.subr.bf16.mxu0 0
    %1188 = vmatpush2.bf16.msra.mxu0 0
    %1189 = vmatprep.subr.bf16.mxu0 0
    %1190 = vmatpush2.bf16.msra.mxu0 0
    %1191 = vmatprep.subr.bf16.mxu0 0
    %1192 = vmatpush2.bf16.msra.mxu0 0
    %1193 = vmatprep.subr.bf16.mxu0 0
    %1194 = vmatpush2.bf16.msra.mxu0 0
    %1195 = vmatprep.subr.bf16.mxu0 0
    %1196 = vmatpush2.bf16.msra.mxu0 0
    %1197 = vmatprep.subr.bf16.mxu0 0
    %1198 = vmatpush2.bf16.msra.mxu0 0
    %1199 = vmatprep.subr.bf16.mxu0 0
    %1200 = vmatpush2.bf16.msra.mxu0 0
    %1201 = vmatprep.subr.bf16.mxu0 0
    %1202 = vmatpush2.bf16.msra.mxu0 0
    %1203 = vmatprep.mubr.bf16.mxu0 0
    %1204 = vmatmul.mubr.bf16.gmra.mxu0 %v1001
    %v1205 = vpop.f32.mrf.mxu0
    %v1206 = vadd.f32 %v1118, %v1205
    %v1207 = vpop.f32.mrf.mxu0
    %v1208 = vpop.f32.mrf.mxu0
    %v1209 = vpop.f32.mrf.mxu0
    %1210 = vdwg.mxu0
    %v1211 = vlaneseq
    %v1212 = vshrl.u32 %v1211, 7
    %v1213 = vsub.s32 4, %v1212
    %v1214 = vrot.slane %v25, %v1213
    %v1215 = vadd.f32 %v1206, %v1214
    %v1216 = vtanh.pop %v1215
    %v1217 = vpack.c.bf16 %v1216, %v1216
    %v1218 = vld [vmem:[%s4 + $0x200] sm:$0xf]
    %v1219 = vld [vmem:[%s4 + $0x204] sm:$0xf]
    %v1220 = vld [vmem:[%s4 + $0x208] sm:$0xf]
    %v1221 = vld [vmem:[%s4 + $0x20c] sm:$0xf]
    %v1222 = vld [vmem:[%s4 + $0x210] sm:$0xf]
    %v1223 = vld [vmem:[%s4 + $0x214] sm:$0xf]
    %v1224 = vld [vmem:[%s4 + $0x218] sm:$0xf]
    %v1225 = vld [vmem:[%s4 + $0x21c] sm:$0xf]
    %v1226 = vld [vmem:[%s4 + $0x220] sm:$0xf]
    %v1227 = vld [vmem:[%s4 + $0x224] sm:$0xf]
    %v1228 = vld [vmem:[%s4 + $0x228] sm:$0xf]
    %v1229 = vld [vmem:[%s4 + $0x22c] sm:$0xf]
    %v1230 = vld [vmem:[%s4 + $0x230] sm:$0xf]
    %v1231 = vld [vmem:[%s4 + $0x234] sm:$0xf]
    %v1232 = vld [vmem:[%s4 + $0x238] sm:$0xf]
    %v1233 = vld [vmem:[%s4 + $0x23c] sm:$0xf]
    %v1234 = vlaneseq
    %v1235 = vshrl.u32 %v1234, 7
    %v1236 = vsub.s32 5, %v1235
    %v1237 = vrot.slane %v25, %v1236
    %v1254 = vunpack.c.l.b16 %v1218
    %v1255 = vunpack.c.l.b16 %v1219
    %v1256 = vunpack.c.l.b16 %v1220
    %v1257 = vunpack.c.l.b16 %v1221
    %v1258 = vunpack.c.l.b16 %v1222
    %v1259 = vunpack.c.l.b16 %v1223
    %v1260 = vunpack.c.l.b16 %v1224
    %v1261 = vunpack.c.l.b16 %v1225
    %v1262 = vunpack.c.l.b16 %v1226
    %v1263 = vunpack.c.l.b16 %v1227
    %v1264 = vunpack.c.l.b16 %v1228
    %v1265 = vunpack.c.l.b16 %v1229
    %v1266 = vunpack.c.l.b16 %v1230
    %v1267 = vunpack.c.l.b16 %v1231
    %v1268 = vunpack.c.l.b16 %v1232
    %v1269 = vunpack.c.l.b16 %v1233
    %v1270 = vpack.c.b16 %v1255, %v1254
    %v1271 = vpack.c.b16 %v1257, %v1256
    %v1272 = vpack.c.b16 %v1259, %v1258
    %v1273 = vpack.c.b16 %v1261, %v1260
    %v1274 = vpack.c.b16 %v1263, %v1262
    %v1275 = vpack.c.b16 %v1265, %v1264
    %v1276 = vpack.c.b16 %v1267, %v1266
    %v1277 = vpack.c.b16 %v1269, %v1268
    %1286 = vmatprep.subr.bf16.mxu0 0
    %1287 = vmatpush1.bf16.msra.mxu0 %v1277
    %1288 = vmatprep.subr.bf16.mxu0 0
    %1289 = vmatpush1.bf16.msra.mxu0 %v1276
    %1290 = vmatprep.subr.bf16.mxu0 0
    %1291 = vmatpush1.bf16.msra.mxu0 %v1275
    %1292 = vmatprep.subr.bf16.mxu0 0
    %1293 = vmatpush1.bf16.msra.mxu0 %v1274
    %1294 = vmatprep.subr.bf16.mxu0 0
    %1295 = vmatpush1.bf16.msra.mxu0 %v1273
    %1296 = vmatprep.subr.bf16.mxu0 0
    %1297 = vmatpush1.bf16.msra.mxu0 %v1272
    %1298 = vmatprep.subr.bf16.mxu0 0
    %1299 = vmatpush1.bf16.msra.mxu0 %v1271
    %1300 = vmatprep.subr.bf16.mxu0 0
    %1301 = vmatpush1.bf16.msra.mxu0 %v1270
    %1302 = vmatprep.subr.bf16.mxu0 0
    %1303 = vmatpush2.bf16.msra.mxu0 0
    %1304 = vmatprep.subr.bf16.mxu0 0
    %1305 = vmatpush2.bf16.msra.mxu0 0
    %1306 = vmatprep.subr.bf16.mxu0 0
    %1307 = vmatpush2.bf16.msra.mxu0 0
    %1308 = vmatprep.subr.bf16.mxu0 0
    %1309 = vmatpush2.bf16.msra.mxu0 0
    %1310 = vmatprep.subr.bf16.mxu0 0
    %1311 = vmatpush2.bf16.msra.mxu0 0
    %1312 = vmatprep.subr.bf16.mxu0 0
    %1313 = vmatpush2.bf16.msra.mxu0 0
    %1314 = vmatprep.subr.bf16.mxu0 0
    %1315 = vmatpush2.bf16.msra.mxu0 0
    %1316 = vmatprep.subr.bf16.mxu0 0
    %1317 = vmatpush2.bf16.msra.mxu0 0
    %1318 = vmatprep.mubr.bf16.mxu0 0
    %1319 = vmatmul.mubr.bf16.gmra.mxu0 %v1217
    %v1320 = vpop.f32.mrf.mxu0
    %v1321 = vadd.f32 %v1237, %v1320
    %v1322 = vpop.f32.mrf.mxu0
    %v1323 = vpop.f32.mrf.mxu0
    %v1324 = vpop.f32.mrf.mxu0
    %1325 = vdwg.mxu0
    %v1326 = vtanh.pop %v1321
    %v1327 = vpack.c.bf16 %v1326, %v1326
    %v1328 = vld [vmem:[%s4 + $0x240] sm:$0xf]
    %v1329 = vld [vmem:[%s4 + $0x244] sm:$0xf]
    %v1330 = vld [vmem:[%s4 + $0x248] sm:$0xf]
    %v1331 = vld [vmem:[%s4 + $0x24c] sm:$0xf]
    %v1332 = vld [vmem:[%s4 + $0x250] sm:$0xf]
    %v1333 = vld [vmem:[%s4 + $0x254] sm:$0xf]
    %v1334 = vld [vmem:[%s4 + $0x258] sm:$0xf]
    %v1335 = vld [vmem:[%s4 + $0x25c] sm:$0xf]
    %v1336 = vld [vmem:[%s4 + $0x260] sm:$0xf]
    %v1337 = vld [vmem:[%s4 + $0x264] sm:$0xf]
    %v1338 = vld [vmem:[%s4 + $0x268] sm:$0xf]
    %v1339 = vld [vmem:[%s4 + $0x26c] sm:$0xf]
    %v1340 = vld [vmem:[%s4 + $0x270] sm:$0xf]
    %v1341 = vld [vmem:[%s4 + $0x274] sm:$0xf]
    %v1342 = vld [vmem:[%s4 + $0x278] sm:$0xf]
    %v1343 = vld [vmem:[%s4 + $0x27c] sm:$0xf]
    %v1344 = vlaneseq
    %v1345 = vshrl.u32 %v1344, 7
    %v1346 = vsub.s32 6, %v1345
    %v1347 = vrot.slane %v25, %v1346
    %v1364 = vunpack.c.l.b16 %v1328
    %v1365 = vunpack.c.l.b16 %v1329
    %v1366 = vunpack.c.l.b16 %v1330
    %v1367 = vunpack.c.l.b16 %v1331
    %v1368 = vunpack.c.l.b16 %v1332
    %v1369 = vunpack.c.l.b16 %v1333
    %v1370 = vunpack.c.l.b16 %v1334
    %v1371 = vunpack.c.l.b16 %v1335
    %v1372 = vunpack.c.l.b16 %v1336
    %v1373 = vunpack.c.l.b16 %v1337
    %v1374 = vunpack.c.l.b16 %v1338
    %v1375 = vunpack.c.l.b16 %v1339
    %v1376 = vunpack.c.l.b16 %v1340
    %v1377 = vunpack.c.l.b16 %v1341
    %v1378 = vunpack.c.l.b16 %v1342
    %v1379 = vunpack.c.l.b16 %v1343
    %v1380 = vpack.c.b16 %v1365, %v1364
    %v1381 = vpack.c.b16 %v1367, %v1366
    %v1382 = vpack.c.b16 %v1369, %v1368
    %v1383 = vpack.c.b16 %v1371, %v1370
    %v1384 = vpack.c.b16 %v1373, %v1372
    %v1385 = vpack.c.b16 %v1375, %v1374
    %v1386 = vpack.c.b16 %v1377, %v1376
    %v1387 = vpack.c.b16 %v1379, %v1378
    %1396 = vmatprep.subr.bf16.mxu0 0
    %1397 = vmatpush1.bf16.msra.mxu0 %v1387
    %1398 = vmatprep.subr.bf16.mxu0 0
    %1399 = vmatpush1.bf16.msra.mxu0 %v1386
    %1400 = vmatprep.subr.bf16.mxu0 0
    %1401 = vmatpush1.bf16.msra.mxu0 %v1385
    %1402 = vmatprep.subr.bf16.mxu0 0
    %1403 = vmatpush1.bf16.msra.mxu0 %v1384
    %1404 = vmatprep.subr.bf16.mxu0 0
    %1405 = vmatpush1.bf16.msra.mxu0 %v1383
    %1406 = vmatprep.subr.bf16.mxu0 0
    %1407 = vmatpush1.bf16.msra.mxu0 %v1382
    %1408 = vmatprep.subr.bf16.mxu0 0
    %1409 = vmatpush1.bf16.msra.mxu0 %v1381
    %1410 = vmatprep.subr.bf16.mxu0 0
    %1411 = vmatpush1.bf16.msra.mxu0 %v1380
    %1412 = vmatprep.subr.bf16.mxu0 0
    %1413 = vmatpush2.bf16.msra.mxu0 0
    %1414 = vmatprep.subr.bf16.mxu0 0
    %1415 = vmatpush2.bf16.msra.mxu0 0
    %1416 = vmatprep.subr.bf16.mxu0 0
    %1417 = vmatpush2.bf16.msra.mxu0 0
    %1418 = vmatprep.subr.bf16.mxu0 0
    %1419 = vmatpush2.bf16.msra.mxu0 0
    %1420 = vmatprep.subr.bf16.mxu0 0
    %1421 = vmatpush2.bf16.msra.mxu0 0
    %1422 = vmatprep.subr.bf16.mxu0 0
    %1423 = vmatpush2.bf16.msra.mxu0 0
    %1424 = vmatprep.subr.bf16.mxu0 0
    %1425 = vmatpush2.bf16.msra.mxu0 0
    %1426 = vmatprep.subr.bf16.mxu0 0
    %1427 = vmatpush2.bf16.msra.mxu0 0
    %1428 = vmatprep.mubr.bf16.mxu0 0
    %1429 = vmatmul.mubr.bf16.gmra.mxu0 %v1327
    %v1430 = vpop.f32.mrf.mxu0
    %v1431 = vadd.f32 %v1347, %v1430
    %v1432 = vpop.f32.mrf.mxu0
    %v1433 = vpop.f32.mrf.mxu0
    %v1434 = vpop.f32.mrf.mxu0
    %1435 = vdwg.mxu0
    %1436 = vst [vmem:[#allocation2] sm:$0x3] %v1431
    // Predicated region
    $region26: #{net_forward.1} parent=1 // pred_check
      _
    $region27: #{net_forward.1} parent=1 // pred_check_branch
      %1438 = sbr.rel (0) target = $region29
    $region28: #{net_forward.1} parent=1 // pred_region
      %s1440 = ssub.s32 32, 32
      %1441 = vsyncadd [#allocation3], %s1440
      %s1443 = sshll.u32 [#allocation2], 4
      %s1444 = int_to_ptr.vmem [resolvable:$true] %s1443
      %1446 = dma.vmem_to_hbm [thread:$0]  %s1444, 32, %s6, [#allocation3]
    $region29: #{net_forward.1} parent=1 // pred_fallthru
      _
    // Predicated region
    $region30: #{net_forward.1} parent=1 // pred_check
      _
    $region31: #{net_forward.1} parent=1 // pred_check_branch
      %1448 = sbr.rel (0) target = $region33
    $region32: #{net_forward.1} parent=1 // pred_region
      %1449 = dma.done [#allocation3], 32
    $region33: #{net_forward.1} parent=1 // pred_fallthru
      _
    %1450 = vsyncpa [#allocation3], 1

</llo_original>
